<compile_context>
chip_gen: v6e
topology: v6e:2x2x1
jax: 0.10.0
libtpu: 0.0.40
codegen_flags: <defaults>
</compile_context>

<pallas_src>
import functools
import math

import jax
import jax.numpy as jnp
from jax.experimental import pallas as pl
from jax.experimental.pallas import tpu as pltpu


def transformer_block_kernel(x_ref,
                             ln1_g, ln1_b,
                             wqkv, bqkv, wo, bo,
                             ln2_g, ln2_b,
                             w1, b1, w2, b2,
                             o_ref,
                             *, n_heads, seq_len):
    R, D = x_ref.shape               # R = B_blk * seq_len rows, D = model dim
    T = seq_len
    B = R // T                       # sequences in this block
    H = n_heads
    Dh = D // H
    eps = 1e-5

    x = x_ref[...].astype(jnp.float32)           # (R, D), elementwise math in f32

    def layernorm(v, g_ref, b_ref):
        # Single-pass stats: the two row reductions can overlap on the XLU.
        mu = jnp.mean(v, axis=-1, keepdims=True)
        m2 = jnp.mean(v * v, axis=-1, keepdims=True)
        var = m2 - mu * mu
        vn = (v - mu) * jax.lax.rsqrt(var + eps)
        return vn * g_ref[...] + b_ref[...]      # (1, D) broadcasts over rows

    def mm(a, w_ref, b_ref):                     # bf16 MXU inputs, f32 accumulate
        return (jnp.dot(a.astype(jnp.bfloat16), w_ref[...],
                        preferred_element_type=jnp.float32)
                + b_ref[...])

    # ---------------- attention sub-layer ----------------
    residual = x
    xn = layernorm(x, ln1_g, ln1_b)                          # seq_layernorm
    qkv = mm(xn, wqkv, bqkv)                                 # (R, 3D) f32, one fused matmul

    # 1/sqrt(Dh) already folded into wq/bq in the wrapper.
    q = qkv[:, :D].astype(jnp.bfloat16).reshape(B, T, D)
    k = qkv[:, D:2 * D].astype(jnp.bfloat16).reshape(B, T, D)
    v = qkv[:, 2 * D:].astype(jnp.bfloat16).reshape(B, T, D)

    head_outs = []
    for h in range(H):                                       # static loop over heads
        sl = slice(h * Dh, (h + 1) * Dh)
        s = jnp.einsum('bqd,bkd->bqk', q[:, :, sl], k[:, :, sl],
                       preferred_element_type=jnp.float32)   # (B, T, T)
        s = s - jnp.max(s, axis=-1, keepdims=True)
        p = jnp.exp(s)
        p = p * pl.reciprocal(jnp.sum(p, axis=-1, keepdims=True), approx=True)
        head_outs.append(
            jnp.einsum('bqk,bkd->bqd', p.astype(jnp.bfloat16), v[:, :, sl],
                       preferred_element_type=jnp.float32))  # (B, T, Dh)
    attn = jnp.concatenate(head_outs, axis=-1).reshape(R, D)
    x = mm(attn, wo, bo) + residual

    # ---------------- feed-forward sub-layer ----------------
    residual = x
    xn = layernorm(x, ln2_g, ln2_b)                          # patch_layernorm
    # TODO(synk): FeedForward is undefined in the source; GELU(tanh) MLP dim->4*dim->dim assumed.
    h1 = jax.nn.gelu(mm(xn, w1, b1), approximate=True)
    y = mm(h1, w2, b2) + residual

    o_ref[...] = y.astype(o_ref.dtype)


def make_params(key, dim, dff):
    ks = jax.random.split(key, 6)
    s = 0.05
    return {
        "ln1_g": jnp.ones((1, dim), jnp.float32),
        "ln1_b": jnp.zeros((1, dim), jnp.float32),
        "wq": jax.random.normal(ks[0], (dim, dim), jnp.float32) * s,
        "bq": jnp.zeros((1, dim), jnp.float32),
        "wk": jax.random.normal(ks[1], (dim, dim), jnp.float32) * s,
        "bk": jnp.zeros((1, dim), jnp.float32),
        "wv": jax.random.normal(ks[2], (dim, dim), jnp.float32) * s,
        "bv": jnp.zeros((1, dim), jnp.float32),
        "wo": jax.random.normal(ks[3], (dim, dim), jnp.float32) * s,
        "bo": jnp.zeros((1, dim), jnp.float32),
        "ln2_g": jnp.ones((1, dim), jnp.float32),
        "ln2_b": jnp.zeros((1, dim), jnp.float32),
        "w1": jax.random.normal(ks[4], (dim, dff), jnp.float32) * s,
        "b1": jnp.zeros((1, dff), jnp.float32),
        "w2": jax.random.normal(ks[5], (dff, dim), jnp.float32) * s,
        "b2": jnp.zeros((1, dim), jnp.float32),
    }


def _choose_seqs_per_block(n_seqs, seq_len, target_rows=256, max_rows=2048):
    """Pick #sequences per grid step: divisor of n_seqs, rows >= target if possible."""
    best = 1
    for b in range(1, n_seqs + 1):
        if n_seqs % b != 0:
            continue
        rows = b * seq_len
        if rows > max_rows and best * seq_len >= target_rows:
            break
        best = b
        if rows >= target_rows:
            break
    # rows must be sublane-aligned (multiple of 8) unless the block covers everything
    if (best * seq_len) % 8 != 0:
        best = n_seqs
    return best


def transformer_block(x, params, n_heads):
    # 'b p t f -> (b p) t f'
    if x.ndim > 3:
        x = x.reshape((-1,) + x.shape[-2:])
    N, T, D = x.shape
    assert D % n_heads == 0, "model dim must be divisible by n_heads"
    d_head = D // n_heads

    b_blk = _choose_seqs_per_block(N, T)
    rows_per_block = b_blk * T
    grid = (N // b_blk,)

    # Fuse QKV weights/biases; fold the attention scale 1/sqrt(d_head) into the
    # Q projection (one-time weight transform, removes a per-block (R, D) mul).
    # Matmul weights are stored bf16 (MXU-native on v5e/v6e/v7x, half the VMEM
    # footprint).  Biases / LN params stay f32.
    scale = 1.0 / math.sqrt(d_head)
    wqkv = jnp.concatenate([params["wq"] * scale, params["wk"], params["wv"]],
                           axis=1).astype(jnp.bfloat16)
    bqkv = jnp.concatenate([params["bq"] * scale, params["bk"], params["bv"]],
                           axis=1)
    param_args = [
        params["ln1_g"], params["ln1_b"],
        wqkv, bqkv,
        params["wo"].astype(jnp.bfloat16), params["bo"],
        params["ln2_g"], params["ln2_b"],
        params["w1"].astype(jnp.bfloat16), params["b1"],
        params["w2"].astype(jnp.bfloat16), params["b2"],
    ]

    def full_spec(arr):
        nd = arr.ndim
        return pl.BlockSpec(arr.shape, lambda i, _nd=nd: (0,) * _nd)

    x2d = x.reshape(N * T, D)
    in_specs = [pl.BlockSpec((rows_per_block, D), lambda i: (i, 0))]
    in_specs += [full_spec(p) for p in param_args]
    out_specs = pl.BlockSpec((rows_per_block, D), lambda i: (i, 0))

    kernel = functools.partial(transformer_block_kernel,
                               n_heads=n_heads, seq_len=T)

    # TODO(synk): at large D/Dff on v7x (64 MiB VMEM), additionally tile w1/w2
    # over the hidden (Dff) dimension instead of keeping them fully resident.
    out2d = pl.pallas_call(
        kernel,
        out_shape=jax.ShapeDtypeStruct((N * T, D), x.dtype),
        grid=grid,
        in_specs=in_specs,
        out_specs=out_specs,
        compiler_params=pltpu.CompilerParams(
            dimension_semantics=("parallel",),
            vmem_limit_bytes=64 * 1024 * 1024),
    )(x2d, *param_args)
    return out2d.reshape(N, T, D)


if __name__ == "__main__":
    dim, n_heads = 32, 4
    batch, patches, seq = 2, 2, 8

    key = jax.random.PRNGKey(0)
    kx, kp = jax.random.split(key)
    x = jax.random.normal(kx, (batch, patches, seq, dim), jnp.float32)
    params = make_params(kp, dim, 4 * dim)

    out = transformer_block(x, params, n_heads)
    out = jax.block_until_ready(out)
    assert out.shape == (batch * patches, seq, dim)
    assert bool(jnp.all(jnp.isfinite(out)))
    print("KERNEL_OK")
</pallas_src>

<mosaic_0001>
module attributes {stable_mosaic.version = 11 : i64} {
  func.func @transformer_block_kernel(%arg0: i32, %arg1: memref<32x32xf32, #tpu.memory_space<vmem>>, %arg2: memref<1x32xf32, #tpu.memory_space<vmem>>, %arg3: memref<1x32xf32, #tpu.memory_space<vmem>>, %arg4: memref<32x96xbf16, #tpu.memory_space<vmem>>, %arg5: memref<1x96xf32, #tpu.memory_space<vmem>>, %arg6: memref<32x32xbf16, #tpu.memory_space<vmem>>, %arg7: memref<1x32xf32, #tpu.memory_space<vmem>>, %arg8: memref<1x32xf32, #tpu.memory_space<vmem>>, %arg9: memref<1x32xf32, #tpu.memory_space<vmem>>, %arg10: memref<32x128xbf16, #tpu.memory_space<vmem>>, %arg11: memref<1x128xf32, #tpu.memory_space<vmem>>, %arg12: memref<128x32xbf16, #tpu.memory_space<vmem>>, %arg13: memref<1x32xf32, #tpu.memory_space<vmem>>, %arg14: memref<32x32xf32, #tpu.memory_space<vmem>>) attributes {dimension_semantics = [#tpu.dimension_semantics<parallel>], iteration_bounds = array<i64: 1>, scalar_prefetch = 0 : i64, scratch_operands = 0 : i64, tpu.core_type = #tpu.core_type<tc>, window_params = [{transform_indices = @transform_0, window_bounds = array<i64: 32, 32>}, {pipeline_mode = #tpu.pipeline_mode<synchronous>, transform_indices = @transform_1, window_bounds = array<i64: 1, 32>}, {pipeline_mode = #tpu.pipeline_mode<synchronous>, transform_indices = @transform_2, window_bounds = array<i64: 1, 32>}, {pipeline_mode = #tpu.pipeline_mode<synchronous>, transform_indices = @transform_3, window_bounds = array<i64: 32, 96>}, {pipeline_mode = #tpu.pipeline_mode<synchronous>, transform_indices = @transform_4, window_bounds = array<i64: 1, 96>}, {pipeline_mode = #tpu.pipeline_mode<synchronous>, transform_indices = @transform_5, window_bounds = array<i64: 32, 32>}, {pipeline_mode = #tpu.pipeline_mode<synchronous>, transform_indices = @transform_6, window_bounds = array<i64: 1, 32>}, {pipeline_mode = #tpu.pipeline_mode<synchronous>, transform_indices = @transform_7, window_bounds = array<i64: 1, 32>}, {pipeline_mode = #tpu.pipeline_mode<synchronous>, transform_indices = @transform_8, window_bounds = array<i64: 1, 32>}, {pipeline_mode = #tpu.pipeline_mode<synchronous>, transform_indices = @transform_9, window_bounds = array<i64: 32, 128>}, {pipeline_mode = #tpu.pipeline_mode<synchronous>, transform_indices = @transform_10, window_bounds = array<i64: 1, 128>}, {pipeline_mode = #tpu.pipeline_mode<synchronous>, transform_indices = @transform_11, window_bounds = array<i64: 128, 32>}, {pipeline_mode = #tpu.pipeline_mode<synchronous>, transform_indices = @transform_12, window_bounds = array<i64: 1, 32>}, {transform_indices = @transform_13, window_bounds = array<i64: 32, 32>}]} {
    %c0 = arith.constant 0 : index
    %c0_0 = arith.constant 0 : index
    %0 = vector.load %arg1[%c0, %c0_0] : memref<32x32xf32, #tpu.memory_space<vmem>>, vector<32x32xf32>
    %cst = arith.constant dense<0.000000e+00> : vector<32xf32>
    %1 = vector.multi_reduction <add>, %0, %cst [1] : vector<32x32xf32> to vector<32xf32>
    %2 = vector.shape_cast %1 : vector<32xf32> to vector<32x1xf32>
    %cst_1 = arith.constant 3.200000e+01 : f32
    %3 = vector.broadcast %cst_1 : f32 to vector<32x1xf32>
    %4 = arith.divf %2, %3 : vector<32x1xf32>
    %5 = arith.mulf %0, %0 : vector<32x32xf32>
    %cst_2 = arith.constant dense<0.000000e+00> : vector<32xf32>
    %6 = vector.multi_reduction <add>, %5, %cst_2 [1] : vector<32x32xf32> to vector<32xf32>
    %7 = vector.shape_cast %6 : vector<32xf32> to vector<32x1xf32>
    %cst_3 = arith.constant 3.200000e+01 : f32
    %8 = vector.broadcast %cst_3 : f32 to vector<32x1xf32>
    %9 = arith.divf %7, %8 : vector<32x1xf32>
    %10 = arith.mulf %4, %4 : vector<32x1xf32>
    %11 = arith.subf %9, %10 : vector<32x1xf32>
    %12 = vector.broadcast %4 : vector<32x1xf32> to vector<32x32xf32>
    %13 = arith.subf %0, %12 : vector<32x32xf32>
    %cst_4 = arith.constant 9.99999974E-6 : f32
    %14 = vector.broadcast %cst_4 : f32 to vector<32x1xf32>
    %15 = arith.addf %11, %14 : vector<32x1xf32>
    %16 = math.rsqrt %15 : vector<32x1xf32>
    %17 = vector.broadcast %16 : vector<32x1xf32> to vector<32x32xf32>
    %18 = arith.mulf %13, %17 : vector<32x32xf32>
    %c0_5 = arith.constant 0 : index
    %c0_6 = arith.constant 0 : index
    %19 = vector.load %arg2[%c0_5, %c0_6] : memref<1x32xf32, #tpu.memory_space<vmem>>, vector<1x32xf32>
    %20 = vector.broadcast %19 : vector<1x32xf32> to vector<32x32xf32>
    %21 = arith.mulf %18, %20 : vector<32x32xf32>
    %c0_7 = arith.constant 0 : index
    %c0_8 = arith.constant 0 : index
    %22 = vector.load %arg3[%c0_7, %c0_8] : memref<1x32xf32, #tpu.memory_space<vmem>>, vector<1x32xf32>
    %23 = vector.broadcast %22 : vector<1x32xf32> to vector<32x32xf32>
    %24 = arith.addf %21, %23 : vector<32x32xf32>
    %25 = arith.truncf %24 : vector<32x32xf32> to vector<32x32xbf16>
    %c0_9 = arith.constant 0 : index
    %c0_10 = arith.constant 0 : index
    %26 = vector.load %arg4[%c0_9, %c0_10] : memref<32x96xbf16, #tpu.memory_space<vmem>>, vector<32x96xbf16>
    %cst_11 = arith.constant dense<0.000000e+00> : vector<32x96xf32>
    %27 = tpu.matmul %25, %26, %cst_11 {dimension_numbers = #tpu.dot_dimension_numbers<[1], [0], [0], [1], [0, 0, 1, 1], [], []>} : vector<32x32xbf16>, vector<32x96xbf16>, vector<32x96xf32> -> vector<32x96xf32>
    %c0_12 = arith.constant 0 : index
    %c0_13 = arith.constant 0 : index
    %28 = vector.load %arg5[%c0_12, %c0_13] : memref<1x96xf32, #tpu.memory_space<vmem>>, vector<1x96xf32>
    %29 = vector.broadcast %28 : vector<1x96xf32> to vector<32x96xf32>
    %30 = arith.addf %27, %29 : vector<32x96xf32>
    %31 = vector.extract_strided_slice %30 {offsets = [0, 0], sizes = [32, 32], strides = [1, 1]} : vector<32x96xf32> to vector<32x32xf32>
    %32 = arith.truncf %31 : vector<32x32xf32> to vector<32x32xbf16>
    %33 = vector.shape_cast %32 : vector<32x32xbf16> to vector<4x8x32xbf16>
    %34 = vector.extract_strided_slice %30 {offsets = [0, 32], sizes = [32, 32], strides = [1, 1]} : vector<32x96xf32> to vector<32x32xf32>
    %35 = arith.truncf %34 : vector<32x32xf32> to vector<32x32xbf16>
    %36 = vector.shape_cast %35 : vector<32x32xbf16> to vector<4x8x32xbf16>
    %37 = vector.extract_strided_slice %30 {offsets = [0, 64], sizes = [32, 32], strides = [1, 1]} : vector<32x96xf32> to vector<32x32xf32>
    %38 = arith.truncf %37 : vector<32x32xf32> to vector<32x32xbf16>
    %39 = vector.shape_cast %38 : vector<32x32xbf16> to vector<4x8x32xbf16>
    %40 = vector.extract_strided_slice %33 {offsets = [0, 0, 0], sizes = [4, 8, 8], strides = [1, 1, 1]} : vector<4x8x32xbf16> to vector<4x8x8xbf16>
    %41 = vector.extract_strided_slice %36 {offsets = [0, 0, 0], sizes = [4, 8, 8], strides = [1, 1, 1]} : vector<4x8x32xbf16> to vector<4x8x8xbf16>
    "tpu.trace_start"() <{level = 10 : i32, message = "bqd,bkd->bqk"}> : () -> ()
    %cst_14 = arith.constant dense<0.000000e+00> : vector<4x8x8xf32>
    %42 = tpu.matmul %40, %41, %cst_14 {dimension_numbers = #tpu.dot_dimension_numbers<[2], [2], [1], [1], [0, 0, 0, 1, 1, 1], [0], [0]>} : vector<4x8x8xbf16>, vector<4x8x8xbf16>, vector<4x8x8xf32> -> vector<4x8x8xf32>
    "tpu.trace_stop"() : () -> ()
    %cst_15 = arith.constant dense<0xFF800000> : vector<4x8xf32>
    %43 = vector.multi_reduction <maximumf>, %42, %cst_15 [2] : vector<4x8x8xf32> to vector<4x8xf32>
    %44 = vector.shape_cast %43 : vector<4x8xf32> to vector<4x8x1xf32>
    %45 = vector.broadcast %44 : vector<4x8x1xf32> to vector<4x8x8xf32>
    %46 = arith.subf %42, %45 : vector<4x8x8xf32>
    %47 = math.exp %46 : vector<4x8x8xf32>
    %cst_16 = arith.constant dense<0.000000e+00> : vector<4x8xf32>
    %48 = vector.multi_reduction <add>, %47, %cst_16 [2] : vector<4x8x8xf32> to vector<4x8xf32>
    %49 = vector.shape_cast %48 : vector<4x8xf32> to vector<4x8x1xf32>
    %50 = tpu.reciprocal %49 {approx = true} : vector<4x8x1xf32> -> vector<4x8x1xf32>
    %51 = vector.broadcast %50 : vector<4x8x1xf32> to vector<4x8x8xf32>
    %52 = arith.mulf %47, %51 : vector<4x8x8xf32>
    %53 = arith.truncf %52 : vector<4x8x8xf32> to vector<4x8x8xbf16>
    %54 = vector.extract_strided_slice %39 {offsets = [0, 0, 0], sizes = [4, 8, 8], strides = [1, 1, 1]} : vector<4x8x32xbf16> to vector<4x8x8xbf16>
    "tpu.trace_start"() <{level = 10 : i32, message = "bqk,bkd->bqd"}> : () -> ()
    %cst_17 = arith.constant dense<0.000000e+00> : vector<4x8x8xf32>
    %55 = tpu.matmul %53, %54, %cst_17 {dimension_numbers = #tpu.dot_dimension_numbers<[2], [1], [1], [2], [0, 0, 0, 1, 1, 2], [0], [0]>} : vector<4x8x8xbf16>, vector<4x8x8xbf16>, vector<4x8x8xf32> -> vector<4x8x8xf32>
    "tpu.trace_stop"() : () -> ()
    %56 = vector.extract_strided_slice %33 {offsets = [0, 0, 8], sizes = [4, 8, 8], strides = [1, 1, 1]} : vector<4x8x32xbf16> to vector<4x8x8xbf16>
    %57 = vector.extract_strided_slice %36 {offsets = [0, 0, 8], sizes = [4, 8, 8], strides = [1, 1, 1]} : vector<4x8x32xbf16> to vector<4x8x8xbf16>
    "tpu.trace_start"() <{level = 10 : i32, message = "bqd,bkd->bqk"}> : () -> ()
    %cst_18 = arith.constant dense<0.000000e+00> : vector<4x8x8xf32>
    %58 = tpu.matmul %56, %57, %cst_18 {dimension_numbers = #tpu.dot_dimension_numbers<[2], [2], [1], [1], [0, 0, 0, 1, 1, 1], [0], [0]>} : vector<4x8x8xbf16>, vector<4x8x8xbf16>, vector<4x8x8xf32> -> vector<4x8x8xf32>
    "tpu.trace_stop"() : () -> ()
    %cst_19 = arith.constant dense<0xFF800000> : vector<4x8xf32>
    %59 = vector.multi_reduction <maximumf>, %58, %cst_19 [2] : vector<4x8x8xf32> to vector<4x8xf32>
    %60 = vector.shape_cast %59 : vector<4x8xf32> to vector<4x8x1xf32>
    %61 = vector.broadcast %60 : vector<4x8x1xf32> to vector<4x8x8xf32>
    %62 = arith.subf %58, %61 : vector<4x8x8xf32>
    %63 = math.exp %62 : vector<4x8x8xf32>
    %cst_20 = arith.constant dense<0.000000e+00> : vector<4x8xf32>
    %64 = vector.multi_reduction <add>, %63, %cst_20 [2] : vector<4x8x8xf32> to vector<4x8xf32>
    %65 = vector.shape_cast %64 : vector<4x8xf32> to vector<4x8x1xf32>
    %66 = tpu.reciprocal %65 {approx = true} : vector<4x8x1xf32> -> vector<4x8x1xf32>
    %67 = vector.broadcast %66 : vector<4x8x1xf32> to vector<4x8x8xf32>
    %68 = arith.mulf %63, %67 : vector<4x8x8xf32>
    %69 = arith.truncf %68 : vector<4x8x8xf32> to vector<4x8x8xbf16>
    %70 = vector.extract_strided_slice %39 {offsets = [0, 0, 8], sizes = [4, 8, 8], strides = [1, 1, 1]} : vector<4x8x32xbf16> to vector<4x8x8xbf16>
    "tpu.trace_start"() <{level = 10 : i32, message = "bqk,bkd->bqd"}> : () -> ()
    %cst_21 = arith.constant dense<0.000000e+00> : vector<4x8x8xf32>
    %71 = tpu.matmul %69, %70, %cst_21 {dimension_numbers = #tpu.dot_dimension_numbers<[2], [1], [1], [2], [0, 0, 0, 1, 1, 2], [0], [0]>} : vector<4x8x8xbf16>, vector<4x8x8xbf16>, vector<4x8x8xf32> -> vector<4x8x8xf32>
    "tpu.trace_stop"() : () -> ()
    %72 = vector.extract_strided_slice %33 {offsets = [0, 0, 16], sizes = [4, 8, 8], strides = [1, 1, 1]} : vector<4x8x32xbf16> to vector<4x8x8xbf16>
    %73 = vector.extract_strided_slice %36 {offsets = [0, 0, 16], sizes = [4, 8, 8], strides = [1, 1, 1]} : vector<4x8x32xbf16> to vector<4x8x8xbf16>
    "tpu.trace_start"() <{level = 10 : i32, message = "bqd,bkd->bqk"}> : () -> ()
    %cst_22 = arith.constant dense<0.000000e+00> : vector<4x8x8xf32>
    %74 = tpu.matmul %72, %73, %cst_22 {dimension_numbers = #tpu.dot_dimension_numbers<[2], [2], [1], [1], [0, 0, 0, 1, 1, 1], [0], [0]>} : vector<4x8x8xbf16>, vector<4x8x8xbf16>, vector<4x8x8xf32> -> vector<4x8x8xf32>
    "tpu.trace_stop"() : () -> ()
    %cst_23 = arith.constant dense<0xFF800000> : vector<4x8xf32>
    %75 = vector.multi_reduction <maximumf>, %74, %cst_23 [2] : vector<4x8x8xf32> to vector<4x8xf32>
    %76 = vector.shape_cast %75 : vector<4x8xf32> to vector<4x8x1xf32>
    %77 = vector.broadcast %76 : vector<4x8x1xf32> to vector<4x8x8xf32>
    %78 = arith.subf %74, %77 : vector<4x8x8xf32>
    %79 = math.exp %78 : vector<4x8x8xf32>
    %cst_24 = arith.constant dense<0.000000e+00> : vector<4x8xf32>
    %80 = vector.multi_reduction <add>, %79, %cst_24 [2] : vector<4x8x8xf32> to vector<4x8xf32>
    %81 = vector.shape_cast %80 : vector<4x8xf32> to vector<4x8x1xf32>
    %82 = tpu.reciprocal %81 {approx = true} : vector<4x8x1xf32> -> vector<4x8x1xf32>
    %83 = vector.broadcast %82 : vector<4x8x1xf32> to vector<4x8x8xf32>
    %84 = arith.mulf %79, %83 : vector<4x8x8xf32>
    %85 = arith.truncf %84 : vector<4x8x8xf32> to vector<4x8x8xbf16>
    %86 = vector.extract_strided_slice %39 {offsets = [0, 0, 16], sizes = [4, 8, 8], strides = [1, 1, 1]} : vector<4x8x32xbf16> to vector<4x8x8xbf16>
    "tpu.trace_start"() <{level = 10 : i32, message = "bqk,bkd->bqd"}> : () -> ()
    %cst_25 = arith.constant dense<0.000000e+00> : vector<4x8x8xf32>
    %87 = tpu.matmul %85, %86, %cst_25 {dimension_numbers = #tpu.dot_dimension_numbers<[2], [1], [1], [2], [0, 0, 0, 1, 1, 2], [0], [0]>} : vector<4x8x8xbf16>, vector<4x8x8xbf16>, vector<4x8x8xf32> -> vector<4x8x8xf32>
    "tpu.trace_stop"() : () -> ()
    %88 = vector.extract_strided_slice %33 {offsets = [0, 0, 24], sizes = [4, 8, 8], strides = [1, 1, 1]} : vector<4x8x32xbf16> to vector<4x8x8xbf16>
    %89 = vector.extract_strided_slice %36 {offsets = [0, 0, 24], sizes = [4, 8, 8], strides = [1, 1, 1]} : vector<4x8x32xbf16> to vector<4x8x8xbf16>
    "tpu.trace_start"() <{level = 10 : i32, message = "bqd,bkd->bqk"}> : () -> ()
    %cst_26 = arith.constant dense<0.000000e+00> : vector<4x8x8xf32>
    %90 = tpu.matmul %88, %89, %cst_26 {dimension_numbers = #tpu.dot_dimension_numbers<[2], [2], [1], [1], [0, 0, 0, 1, 1, 1], [0], [0]>} : vector<4x8x8xbf16>, vector<4x8x8xbf16>, vector<4x8x8xf32> -> vector<4x8x8xf32>
    "tpu.trace_stop"() : () -> ()
    %cst_27 = arith.constant dense<0xFF800000> : vector<4x8xf32>
    %91 = vector.multi_reduction <maximumf>, %90, %cst_27 [2] : vector<4x8x8xf32> to vector<4x8xf32>
    %92 = vector.shape_cast %91 : vector<4x8xf32> to vector<4x8x1xf32>
    %93 = vector.broadcast %92 : vector<4x8x1xf32> to vector<4x8x8xf32>
    %94 = arith.subf %90, %93 : vector<4x8x8xf32>
    %95 = math.exp %94 : vector<4x8x8xf32>
    %cst_28 = arith.constant dense<0.000000e+00> : vector<4x8xf32>
    %96 = vector.multi_reduction <add>, %95, %cst_28 [2] : vector<4x8x8xf32> to vector<4x8xf32>
    %97 = vector.shape_cast %96 : vector<4x8xf32> to vector<4x8x1xf32>
    %98 = tpu.reciprocal %97 {approx = true} : vector<4x8x1xf32> -> vector<4x8x1xf32>
    %99 = vector.broadcast %98 : vector<4x8x1xf32> to vector<4x8x8xf32>
    %100 = arith.mulf %95, %99 : vector<4x8x8xf32>
    %101 = arith.truncf %100 : vector<4x8x8xf32> to vector<4x8x8xbf16>
    %102 = vector.extract_strided_slice %39 {offsets = [0, 0, 24], sizes = [4, 8, 8], strides = [1, 1, 1]} : vector<4x8x32xbf16> to vector<4x8x8xbf16>
    "tpu.trace_start"() <{level = 10 : i32, message = "bqk,bkd->bqd"}> : () -> ()
    %cst_29 = arith.constant dense<0.000000e+00> : vector<4x8x8xf32>
    %103 = tpu.matmul %101, %102, %cst_29 {dimension_numbers = #tpu.dot_dimension_numbers<[2], [1], [1], [2], [0, 0, 0, 1, 1, 2], [0], [0]>} : vector<4x8x8xbf16>, vector<4x8x8xbf16>, vector<4x8x8xf32> -> vector<4x8x8xf32>
    "tpu.trace_stop"() : () -> ()
    %104 = tpu.concatenate %55, %71, %87, %103 in 2 : vector<4x8x8xf32>, vector<4x8x8xf32>, vector<4x8x8xf32>, vector<4x8x8xf32> -> vector<4x8x32xf32>
    %105 = vector.shape_cast %104 : vector<4x8x32xf32> to vector<32x32xf32>
    %106 = arith.truncf %105 : vector<32x32xf32> to vector<32x32xbf16>
    %c0_30 = arith.constant 0 : index
    %c0_31 = arith.constant 0 : index
    %107 = vector.load %arg6[%c0_30, %c0_31] : memref<32x32xbf16, #tpu.memory_space<vmem>>, vector<32x32xbf16>
    %cst_32 = arith.constant dense<0.000000e+00> : vector<32x32xf32>
    %108 = tpu.matmul %106, %107, %cst_32 {dimension_numbers = #tpu.dot_dimension_numbers<[1], [0], [0], [1], [0, 0, 1, 1], [], []>} : vector<32x32xbf16>, vector<32x32xbf16>, vector<32x32xf32> -> vector<32x32xf32>
    %c0_33 = arith.constant 0 : index
    %c0_34 = arith.constant 0 : index
    %109 = vector.load %arg7[%c0_33, %c0_34] : memref<1x32xf32, #tpu.memory_space<vmem>>, vector<1x32xf32>
    %110 = vector.broadcast %109 : vector<1x32xf32> to vector<32x32xf32>
    %111 = arith.addf %108, %110 : vector<32x32xf32>
    %112 = arith.addf %111, %0 : vector<32x32xf32>
    %cst_35 = arith.constant dense<0.000000e+00> : vector<32xf32>
    %113 = vector.multi_reduction <add>, %112, %cst_35 [1] : vector<32x32xf32> to vector<32xf32>
    %114 = vector.shape_cast %113 : vector<32xf32> to vector<32x1xf32>
    %cst_36 = arith.constant 3.200000e+01 : f32
    %115 = vector.broadcast %cst_36 : f32 to vector<32x1xf32>
    %116 = arith.divf %114, %115 : vector<32x1xf32>
    %117 = arith.mulf %112, %112 : vector<32x32xf32>
    %cst_37 = arith.constant dense<0.000000e+00> : vector<32xf32>
    %118 = vector.multi_reduction <add>, %117, %cst_37 [1] : vector<32x32xf32> to vector<32xf32>
    %119 = vector.shape_cast %118 : vector<32xf32> to vector<32x1xf32>
    %cst_38 = arith.constant 3.200000e+01 : f32
    %120 = vector.broadcast %cst_38 : f32 to vector<32x1xf32>
    %121 = arith.divf %119, %120 : vector<32x1xf32>
    %122 = arith.mulf %116, %116 : vector<32x1xf32>
    %123 = arith.subf %121, %122 : vector<32x1xf32>
    %124 = vector.broadcast %116 : vector<32x1xf32> to vector<32x32xf32>
    %125 = arith.subf %112, %124 : vector<32x32xf32>
    %cst_39 = arith.constant 9.99999974E-6 : f32
    %126 = vector.broadcast %cst_39 : f32 to vector<32x1xf32>
    %127 = arith.addf %123, %126 : vector<32x1xf32>
    %128 = math.rsqrt %127 : vector<32x1xf32>
    %129 = vector.broadcast %128 : vector<32x1xf32> to vector<32x32xf32>
    %130 = arith.mulf %125, %129 : vector<32x32xf32>
    %c0_40 = arith.constant 0 : index
    %c0_41 = arith.constant 0 : index
    %131 = vector.load %arg8[%c0_40, %c0_41] : memref<1x32xf32, #tpu.memory_space<vmem>>, vector<1x32xf32>
    %132 = vector.broadcast %131 : vector<1x32xf32> to vector<32x32xf32>
    %133 = arith.mulf %130, %132 : vector<32x32xf32>
    %c0_42 = arith.constant 0 : index
    %c0_43 = arith.constant 0 : index
    %134 = vector.load %arg9[%c0_42, %c0_43] : memref<1x32xf32, #tpu.memory_space<vmem>>, vector<1x32xf32>
    %135 = vector.broadcast %134 : vector<1x32xf32> to vector<32x32xf32>
    %136 = arith.addf %133, %135 : vector<32x32xf32>
    %137 = arith.truncf %136 : vector<32x32xf32> to vector<32x32xbf16>
    %c0_44 = arith.constant 0 : index
    %c0_45 = arith.constant 0 : index
    %138 = vector.load %arg10[%c0_44, %c0_45] : memref<32x128xbf16, #tpu.memory_space<vmem>>, vector<32x128xbf16>
    %cst_46 = arith.constant dense<0.000000e+00> : vector<32x128xf32>
    %139 = tpu.matmul %137, %138, %cst_46 {dimension_numbers = #tpu.dot_dimension_numbers<[1], [0], [0], [1], [0, 0, 1, 1], [], []>} : vector<32x32xbf16>, vector<32x128xbf16>, vector<32x128xf32> -> vector<32x128xf32>
    %c0_47 = arith.constant 0 : index
    %c0_48 = arith.constant 0 : index
    %140 = vector.load %arg11[%c0_47, %c0_48] : memref<1x128xf32, #tpu.memory_space<vmem>>, vector<1x128xf32>
    %141 = vector.broadcast %140 : vector<1x128xf32> to vector<32x128xf32>
    %142 = arith.addf %139, %141 : vector<32x128xf32>
    %143 = arith.mulf %142, %142 : vector<32x128xf32>
    %144 = arith.mulf %142, %143 : vector<32x128xf32>
    %cst_49 = arith.constant 4.471500e-02 : f32
    %145 = vector.broadcast %cst_49 : f32 to vector<32x128xf32>
    %146 = arith.mulf %145, %144 : vector<32x128xf32>
    %147 = arith.addf %142, %146 : vector<32x128xf32>
    %cst_50 = arith.constant 0.797884583 : f32
    %148 = vector.broadcast %cst_50 : f32 to vector<32x128xf32>
    %149 = arith.mulf %148, %147 : vector<32x128xf32>
    %150 = math.tanh %149 : vector<32x128xf32>
    %cst_51 = arith.constant 1.000000e+00 : f32
    %151 = vector.broadcast %cst_51 : f32 to vector<32x128xf32>
    %152 = arith.addf %151, %150 : vector<32x128xf32>
    %cst_52 = arith.constant 5.000000e-01 : f32
    %153 = vector.broadcast %cst_52 : f32 to vector<32x128xf32>
    %154 = arith.mulf %153, %152 : vector<32x128xf32>
    %155 = arith.mulf %142, %154 : vector<32x128xf32>
    %156 = arith.truncf %155 : vector<32x128xf32> to vector<32x128xbf16>
    %c0_53 = arith.constant 0 : index
    %c0_54 = arith.constant 0 : index
    %157 = vector.load %arg12[%c0_53, %c0_54] : memref<128x32xbf16, #tpu.memory_space<vmem>>, vector<128x32xbf16>
    %cst_55 = arith.constant dense<0.000000e+00> : vector<32x32xf32>
    %158 = tpu.matmul %156, %157, %cst_55 {dimension_numbers = #tpu.dot_dimension_numbers<[1], [0], [0], [1], [0, 0, 1, 1], [], []>} : vector<32x128xbf16>, vector<128x32xbf16>, vector<32x32xf32> -> vector<32x32xf32>
    %c0_56 = arith.constant 0 : index
    %c0_57 = arith.constant 0 : index
    %159 = vector.load %arg13[%c0_56, %c0_57] : memref<1x32xf32, #tpu.memory_space<vmem>>, vector<1x32xf32>
    %160 = vector.broadcast %159 : vector<1x32xf32> to vector<32x32xf32>
    %161 = arith.addf %158, %160 : vector<32x32xf32>
    %162 = arith.addf %161, %112 : vector<32x32xf32>
    %c0_58 = arith.constant 0 : index
    %c0_59 = arith.constant 0 : index
    %163 = vector.load %arg14[%c0_58, %c0_59] : memref<32x32xf32, #tpu.memory_space<vmem>>, vector<32x32xf32>
    tpu.vector_store %arg14[%c0_58, %c0_59], %162 {strides = array<i32>} : memref<32x32xf32, #tpu.memory_space<vmem>>, vector<32x32xf32>,
    return
  }
  func.func @transform_0(%arg0: i32) -> (i32, i32) {
    %c0_i32 = arith.constant 0 : i32
    %c0_i32_0 = arith.constant 0 : i32
    return %arg0, %c0_i32 : i32, i32
  }
  func.func @transform_1(%arg0: i32) -> (i32, i32) {
    %c0_i32 = arith.constant 0 : i32
    %c0_i32_0 = arith.constant 0 : i32
    %c0_i32_1 = arith.constant 0 : i32
    return %c0_i32, %c0_i32_0 : i32, i32
  }
  func.func @transform_2(%arg0: i32) -> (i32, i32) {
    %c0_i32 = arith.constant 0 : i32
    %c0_i32_0 = arith.constant 0 : i32
    %c0_i32_1 = arith.constant 0 : i32
    return %c0_i32, %c0_i32_0 : i32, i32
  }
  func.func @transform_3(%arg0: i32) -> (i32, i32) {
    %c0_i32 = arith.constant 0 : i32
    %c0_i32_0 = arith.constant 0 : i32
    %c0_i32_1 = arith.constant 0 : i32
    return %c0_i32, %c0_i32_0 : i32, i32
  }
  func.func @transform_4(%arg0: i32) -> (i32, i32) {
    %c0_i32 = arith.constant 0 : i32
    %c0_i32_0 = arith.constant 0 : i32
    %c0_i32_1 = arith.constant 0 : i32
    return %c0_i32, %c0_i32_0 : i32, i32
  }
  func.func @transform_5(%arg0: i32) -> (i32, i32) {
    %c0_i32 = arith.constant 0 : i32
    %c0_i32_0 = arith.constant 0 : i32
    %c0_i32_1 = arith.constant 0 : i32
    return %c0_i32, %c0_i32_0 : i32, i32
  }
  func.func @transform_6(%arg0: i32) -> (i32, i32) {
    %c0_i32 = arith.constant 0 : i32
    %c0_i32_0 = arith.constant 0 : i32
    %c0_i32_1 = arith.constant 0 : i32
    return %c0_i32, %c0_i32_0 : i32, i32
  }
  func.func @transform_7(%arg0: i32) -> (i32, i32) {
    %c0_i32 = arith.constant 0 : i32
    %c0_i32_0 = arith.constant 0 : i32
    %c0_i32_1 = arith.constant 0 : i32
    return %c0_i32, %c0_i32_0 : i32, i32
  }
  func.func @transform_8(%arg0: i32) -> (i32, i32) {
    %c0_i32 = arith.constant 0 : i32
    %c0_i32_0 = arith.constant 0 : i32
    %c0_i32_1 = arith.constant 0 : i32
    return %c0_i32, %c0_i32_0 : i32, i32
  }
  func.func @transform_9(%arg0: i32) -> (i32, i32) {
    %c0_i32 = arith.constant 0 : i32
    %c0_i32_0 = arith.constant 0 : i32
    %c0_i32_1 = arith.constant 0 : i32
    return %c0_i32, %c0_i32_0 : i32, i32
  }
  func.func @transform_10(%arg0: i32) -> (i32, i32) {
    %c0_i32 = arith.constant 0 : i32
    %c0_i32_0 = arith.constant 0 : i32
    %c0_i32_1 = arith.constant 0 : i32
    return %c0_i32, %c0_i32_0 : i32, i32
  }
  func.func @transform_11(%arg0: i32) -> (i32, i32) {
    %c0_i32 = arith.constant 0 : i32
    %c0_i32_0 = arith.constant 0 : i32
    %c0_i32_1 = arith.constant 0 : i32
    return %c0_i32, %c0_i32_0 : i32, i32
  }
  func.func @transform_12(%arg0: i32) -> (i32, i32) {
    %c0_i32 = arith.constant 0 : i32
    %c0_i32_0 = arith.constant 0 : i32
    %c0_i32_1 = arith.constant 0 : i32
    return %c0_i32, %c0_i32_0 : i32, i32
  }
  func.func @transform_13(%arg0: i32) -> (i32, i32) {
    %c0_i32 = arith.constant 0 : i32
    %c0_i32_0 = arith.constant 0 : i32
    return %arg0, %c0_i32 : i32, i32
  }
}

</mosaic_0001>

<llo_original>
// kernel: tpu_custom_call.1
$region0: #{tpu_custom_call.1}
  #allocation0 [shape = 'u32[]', space=smem, size = 0x4, offset = 0x4, fixed_abs, tag = 'smem constant byte address 0x4 - core index']
  #allocation1 [shape = 'u32[144,128]{1,0:T(1,128)}', space=vmem, size = 0x12000, scoped, tag = 'internal scratch']
  %s0 = inlined_call_operand.vmem [shape: f32[32,32], index: 0, kind: input, shape index: {}]
  %s1 = inlined_call_operand.vmem [shape: f32[1,32], index: 1, kind: input, shape index: {}]
  %s2 = inlined_call_operand.vmem [shape: f32[1,32], index: 2, kind: input, shape index: {}]
  %s3 = inlined_call_operand.vmem [shape: bf16[32,96], index: 3, kind: input, shape index: {}]
  %s4 = inlined_call_operand.vmem [shape: f32[1,96], index: 4, kind: input, shape index: {}]
  %s5 = inlined_call_operand.vmem [shape: bf16[32,32], index: 5, kind: input, shape index: {}]
  %s6 = inlined_call_operand.vmem [shape: f32[1,32], index: 6, kind: input, shape index: {}]
  %s7 = inlined_call_operand.hbm [shape: f32[1,32], index: 7, kind: input, shape index: {}]
  %s8 = inlined_call_operand.hbm [shape: f32[1,32], index: 8, kind: input, shape index: {}]
  %s9 = inlined_call_operand.vmem [shape: bf16[32,128], index: 9, kind: input, shape index: {}]
  %s10 = inlined_call_operand.hbm [shape: f32[1,128], index: 10, kind: input, shape index: {}]
  %s11 = inlined_call_operand.vmem [shape: bf16[128,32], index: 11, kind: input, shape index: {}]
  %s12 = inlined_call_operand.vmem [shape: f32[1,32], index: 12, kind: input, shape index: {}]
  %s13 = inlined_call_operand.hbm [shape: f32[32,32], index: 13, kind: output, shape index: {}]
  %s14 = sld [smem:[#allocation0]]
  $region74: #{tpu_custom_call.1} parent=0
    _
  %s16 = ssub.s32 1, %s14
  %s17 = scalar_select 0, %s16, %s14
  $region1: #{tpu_custom_call.1} parent=0
    #allocation2 [shape = 'u8[512]{0}', space=vmem, size = 0x400, scoped, tag = 'input window, operand 7, single buffered']
    #allocation3 [shape = 's32[1]{0}', space=sflag, size = 0x4, scoped, tag = 'scoped memory for tpu_custom_call.1']
    #allocation4 [shape = 's32[1]{0}', space=sflag, size = 0x4, scoped, tag = 'scoped memory for tpu_custom_call.1']
    #allocation5 [shape = 'u8[512]{0}', space=vmem, size = 0x400, scoped, tag = 'input window, operand 8, single buffered']
    #allocation6 [shape = 's32[1]{0}', space=sflag, size = 0x4, scoped, tag = 'scoped memory for tpu_custom_call.1']
    #allocation7 [shape = 'u8[512]{0}', space=vmem, size = 0x400, scoped, tag = 'input window, operand 10, single buffered']
    #allocation8 [shape = 'u8[16384]{0}', space=vmem, size = 0x4000, scoped, tag = 'output window, operand 0, single buffered']
    %18 = vsyncpa [#allocation3], 0
    %19 = vsyncpa [#allocation6], 0
    %20 = vsyncpa [#allocation4], 0
    // Predicated region
    $region2: #{tpu_custom_call.1} parent=1 // pred_check
      _
    $region3: #{tpu_custom_call.1} parent=1 // pred_check_branch
      %22 = sbr.rel (0) target = $region5
    $region4: #{tpu_custom_call.1} parent=1 // pred_region
      _
    $region5: #{tpu_custom_call.1} parent=1 // pred_fallthru
      _
    // Predicated region
    $region6: #{tpu_custom_call.1} parent=1 // pred_check
      _
    $region7: #{tpu_custom_call.1} parent=1 // pred_check_branch
      %24 = sbr.rel (0) target = $region9
    $region8: #{tpu_custom_call.1} parent=1 // pred_region
      _
    $region9: #{tpu_custom_call.1} parent=1 // pred_fallthru
      _
    // Predicated region
    $region10: #{tpu_custom_call.1} parent=1 // pred_check
      _
    $region11: #{tpu_custom_call.1} parent=1 // pred_check_branch
      %26 = sbr.rel (0) target = $region13
    $region12: #{tpu_custom_call.1} parent=1 // pred_region
      _
    $region13: #{tpu_custom_call.1} parent=1 // pred_fallthru
      _
    // Predicated region
    $region14: #{tpu_custom_call.1} parent=1 // pred_check
      _
    $region15: #{tpu_custom_call.1} parent=1 // pred_check_branch
      %28 = sbr.rel (0) target = $region17
    $region16: #{tpu_custom_call.1} parent=1 // pred_region
      _
    $region17: #{tpu_custom_call.1} parent=1 // pred_fallthru
      _
    // Predicated region
    $region18: #{tpu_custom_call.1} parent=1 // pred_check
      _
    $region19: #{tpu_custom_call.1} parent=1 // pred_check_branch
      %30 = sbr.rel (0) target = $region21
    $region20: #{tpu_custom_call.1} parent=1 // pred_region
      _
    $region21: #{tpu_custom_call.1} parent=1 // pred_fallthru
      _
    // Predicated region
    $region22: #{tpu_custom_call.1} parent=1 // pred_check
      _
    $region23: #{tpu_custom_call.1} parent=1 // pred_check_branch
      %32 = sbr.rel (0) target = $region25
    $region24: #{tpu_custom_call.1} parent=1 // pred_region
      _
    $region25: #{tpu_custom_call.1} parent=1 // pred_fallthru
      _
    // Predicated region
    $region26: #{tpu_custom_call.1} parent=1 // pred_check
      _
    $region27: #{tpu_custom_call.1} parent=1 // pred_check_branch
      %34 = sbr.rel (0) target = $region29
    $region28: #{tpu_custom_call.1} parent=1 // pred_region
      _
    $region29: #{tpu_custom_call.1} parent=1 // pred_fallthru
      _
    // Predicated region
    $region30: #{tpu_custom_call.1} parent=1 // pred_check
      _
    $region31: #{tpu_custom_call.1} parent=1 // pred_check_branch
      %36 = sbr.rel (0) target = $region33
    $region32: #{tpu_custom_call.1} parent=1 // pred_region
      %s38 = ssub.s32 16, 16
      %39 = vsyncadd [#allocation3], %s38
      %s41 = sshll.u32 [#allocation2], 4
      %s42 = int_to_ptr.vmem [resolvable:$true] %s41
      %44 = dma.hbm_to_vmem [thread:$0]  %s7, 16, %s42, [#allocation3]
    $region33: #{tpu_custom_call.1} parent=1 // pred_fallthru
      _
    // Predicated region
    $region34: #{tpu_custom_call.1} parent=1 // pred_check
      _
    $region35: #{tpu_custom_call.1} parent=1 // pred_check_branch
      %46 = sbr.rel (0) target = $region37
    $region36: #{tpu_custom_call.1} parent=1 // pred_region
      %s48 = ssub.s32 16, 16
      %49 = vsyncadd [#allocation6], %s48
      %s51 = sshll.u32 [#allocation5], 4
      %s52 = int_to_ptr.vmem [resolvable:$true] %s51
      %54 = dma.hbm_to_vmem [thread:$0]  %s8, 16, %s52, [#allocation6]
    $region37: #{tpu_custom_call.1} parent=1 // pred_fallthru
      _
    // Predicated region
    $region38: #{tpu_custom_call.1} parent=1 // pred_check
      _
    $region39: #{tpu_custom_call.1} parent=1 // pred_check_branch
      %56 = sbr.rel (0) target = $region41
    $region40: #{tpu_custom_call.1} parent=1 // pred_region
      _
    $region41: #{tpu_custom_call.1} parent=1 // pred_fallthru
      _
    // Predicated region
    $region42: #{tpu_custom_call.1} parent=1 // pred_check
      _
    $region43: #{tpu_custom_call.1} parent=1 // pred_check_branch
      %58 = sbr.rel (0) target = $region45
    $region44: #{tpu_custom_call.1} parent=1 // pred_region
      %s60 = ssub.s32 16, 16
      %61 = vsyncadd [#allocation6], %s60
      %s63 = sshll.u32 [#allocation7], 4
      %s64 = int_to_ptr.vmem [resolvable:$true] %s63
      %66 = dma.hbm_to_vmem [thread:$0]  %s10, 16, %s64, [#allocation6]
    $region45: #{tpu_custom_call.1} parent=1 // pred_fallthru
      _
    // Predicated region
    $region46: #{tpu_custom_call.1} parent=1 // pred_check
      _
    $region47: #{tpu_custom_call.1} parent=1 // pred_check_branch
      %68 = sbr.rel (0) target = $region49
    $region48: #{tpu_custom_call.1} parent=1 // pred_region
      _
    $region49: #{tpu_custom_call.1} parent=1 // pred_fallthru
      _
    // Predicated region
    $region50: #{tpu_custom_call.1} parent=1 // pred_check
      _
    $region51: #{tpu_custom_call.1} parent=1 // pred_check_branch
      %70 = sbr.rel (0) target = $region53
    $region52: #{tpu_custom_call.1} parent=1 // pred_region
      _
    $region53: #{tpu_custom_call.1} parent=1 // pred_fallthru
      _
    // Predicated region
    $region54: #{tpu_custom_call.1} parent=1 // pred_check
      _
    $region55: #{tpu_custom_call.1} parent=1 // pred_check_branch
      %72 = sbr.rel (0) target = $region57
    $region56: #{tpu_custom_call.1} parent=1 // pred_region
      %73 = dma.done [#allocation3], 16
    $region57: #{tpu_custom_call.1} parent=1 // pred_fallthru
      _
    // Predicated region
    $region58: #{tpu_custom_call.1} parent=1 // pred_check
      _
    $region59: #{tpu_custom_call.1} parent=1 // pred_check_branch
      %75 = sbr.rel (0) target = $region61
    $region60: #{tpu_custom_call.1} parent=1 // pred_region
      %76 = dma.done [#allocation6], 16
    $region61: #{tpu_custom_call.1} parent=1 // pred_fallthru
      _
    // Predicated region
    $region62: #{tpu_custom_call.1} parent=1 // pred_check
      _
    $region63: #{tpu_custom_call.1} parent=1 // pred_check_branch
      %78 = sbr.rel (0) target = $region65
    $region64: #{tpu_custom_call.1} parent=1 // pred_region
      %79 = dma.done [#allocation6], 16
    $region65: #{tpu_custom_call.1} parent=1 // pred_fallthru
      _
    %v81 = vld [vmem:[%s0] sm:$0xff]
    %v82 = vld [vmem:[%s0 + $0x8] sm:$0xff]
    %v83 = vld [vmem:[%s0 + $0x10] sm:$0xff]
    %v84 = vld [vmem:[%s0 + $0x18] sm:$0xff]
    %vm85 = vcmask 261120
    %v86 = vsel %vm85, %v81, 0.0
    %87 = vadd.xlane.f32.xlu0 %v86
    %v88 = vpop.xlane.xlu0 %87
    %v89 = vsel %vm85, %v82, 0.0
    %90 = vadd.xlane.f32.xlu0 %v89
    %v91 = vpop.xlane.xlu0 %90
    %v92 = vsel %vm85, %v83, 0.0
    %93 = vadd.xlane.f32.xlu0 %v92
    %v94 = vpop.xlane.xlu0 %93
    %v95 = vsel %vm85, %v84, 0.0
    %96 = vadd.xlane.f32.xlu0 %v95
    %v97 = vpop.xlane.xlu0 %96
    %v98 = vrcp.pop 32.0
    %v99 = vmul.f32 %v88, %v98
    %v100 = vmul.f32 %v91, %v98
    %v101 = vmul.f32 %v94, %v98
    %v102 = vmul.f32 %v97, %v98
    %v103 = vmul.f32 %v81, %v81
    %v104 = vmul.f32 %v82, %v82
    %v105 = vmul.f32 %v83, %v83
    %v106 = vmul.f32 %v84, %v84
    %v107 = vsel %vm85, %v103, 0.0
    %108 = vadd.xlane.f32.xlu0 %v107
    %v109 = vpop.xlane.xlu0 %108
    %v110 = vsel %vm85, %v104, 0.0
    %111 = vadd.xlane.f32.xlu0 %v110
    %v112 = vpop.xlane.xlu0 %111
    %v113 = vsel %vm85, %v105, 0.0
    %114 = vadd.xlane.f32.xlu0 %v113
    %v115 = vpop.xlane.xlu0 %114
    %v116 = vsel %vm85, %v106, 0.0
    %117 = vadd.xlane.f32.xlu0 %v116
    %v118 = vpop.xlane.xlu0 %117
    %v119 = vmul.f32 %v109, %v98
    %v120 = vmul.f32 %v112, %v98
    %v121 = vmul.f32 %v115, %v98
    %v122 = vmul.f32 %v118, %v98
    %v123 = vmul.f32 %v99, %v99
    %v124 = vmul.f32 %v100, %v100
    %v125 = vmul.f32 %v101, %v101
    %v126 = vmul.f32 %v102, %v102
    %v127 = vsub.f32 %v119, %v123
    %v128 = vsub.f32 %v120, %v124
    %v129 = vsub.f32 %v121, %v125
    %v130 = vsub.f32 %v122, %v126
    %v131 = vsub.f32 %v81, %v99
    %v132 = vsub.f32 %v82, %v100
    %v133 = vsub.f32 %v83, %v101
    %v134 = vsub.f32 %v84, %v102
    %v135 = vadd.f32 %v127, 1e-05
    %v136 = vadd.f32 %v128, 1e-05
    %v137 = vadd.f32 %v129, 1e-05
    %v138 = vadd.f32 %v130, 1e-05
    %v139 = vrsqrt.pop %v135
    %v140 = vrsqrt.pop %v136
    %v141 = vrsqrt.pop %v137
    %v142 = vrsqrt.pop %v138
    %v143 = vmul.f32 %v131, %v139
    %v144 = vmul.f32 %v132, %v140
    %v145 = vmul.f32 %v133, %v141
    %v146 = vmul.f32 %v134, %v142
    %v147 = vld [vmem:[%s1] sm:$0x1]
    %v149 = vlaneseq
    %v150 = vshrl.u32 %v149, 7
    %v151 = vsub.s32 0, %v150
    %v152 = vrot.slane %v147, %v151
    %v154 = vmul.f32 %v143, %v152
    %v155 = vmul.f32 %v144, %v152
    %v156 = vmul.f32 %v145, %v152
    %v157 = vmul.f32 %v146, %v152
    %v158 = vld [vmem:[%s2] sm:$0x1]
    %v160 = vlaneseq
    %v161 = vshrl.u32 %v160, 7
    %v162 = vsub.s32 0, %v161
    %v163 = vrot.slane %v158, %v162
    %v165 = vadd.f32 %v154, %v163
    %v166 = vadd.f32 %v155, %v163
    %v167 = vadd.f32 %v156, %v163
    %v168 = vadd.f32 %v157, %v163
    %v169 = vpack.c.bf16 %v166, %v165
    %v170 = vpack.c.bf16 %v168, %v167
    %v171 = vld [vmem:[%s3] sm:$0xf]
    %v172 = vld [vmem:[%s3 + $0x4] sm:$0xf]
    %v173 = vld [vmem:[%s3 + $0x8] sm:$0xf]
    %v174 = vld [vmem:[%s3 + $0xc] sm:$0xf]
    %v175 = vld [vmem:[%s4] sm:$0x1]
    %v177 = vlaneseq
    %v178 = vshrl.u32 %v177, 7
    %v179 = vsub.s32 0, %v178
    %v180 = vrot.slane %v175, %v179
    %v186 = vunpack.c.l.b16 %v171
    %v187 = vunpack.c.l.b16 %v172
    %v188 = vunpack.c.l.b16 %v173
    %v189 = vunpack.c.l.b16 %v174
    %v190 = vpack.c.b16 %v187, %v186
    %v191 = vpack.c.b16 %v189, %v188
    %v195 = vsel %vm85, %v169, 0
    %v198 = vsel %vm85, %v170, 0
    %200 = vmatprep.subr.bf16.mxu0 0
    %201 = vmatpush1.bf16.msra.mxu0 0
    %202 = vmatprep.subr.bf16.mxu0 0
    %203 = vmatpush1.bf16.msra.mxu0 0
    %204 = vmatprep.subr.bf16.mxu0 0
    %205 = vmatpush1.bf16.msra.mxu0 0
    %206 = vmatprep.subr.bf16.mxu0 0
    %207 = vmatpush1.bf16.msra.mxu0 0
    %208 = vmatprep.subr.bf16.mxu0 0
    %209 = vmatpush1.bf16.msra.mxu0 0
    %210 = vmatprep.subr.bf16.mxu0 0
    %211 = vmatpush1.bf16.msra.mxu0 0
    %212 = vmatprep.subr.bf16.mxu0 0
    %213 = vmatpush1.bf16.msra.mxu0 %v191
    %214 = vmatprep.subr.bf16.mxu0 0
    %215 = vmatpush1.bf16.msra.mxu0 %v190
    %216 = vmatprep.subr.bf16.mxu0 0
    %217 = vmatpush2.bf16.msra.mxu0 0
    %218 = vmatprep.subr.bf16.mxu0 0
    %219 = vmatpush2.bf16.msra.mxu0 0
    %220 = vmatprep.subr.bf16.mxu0 0
    %221 = vmatpush2.bf16.msra.mxu0 0
    %222 = vmatprep.subr.bf16.mxu0 0
    %223 = vmatpush2.bf16.msra.mxu0 0
    %224 = vmatprep.subr.bf16.mxu0 0
    %225 = vmatpush2.bf16.msra.mxu0 0
    %226 = vmatprep.subr.bf16.mxu0 0
    %227 = vmatpush2.bf16.msra.mxu0 0
    %228 = vmatprep.subr.bf16.mxu0 0
    %229 = vmatpush2.bf16.msra.mxu0 0
    %230 = vmatprep.subr.bf16.mxu0 0
    %231 = vmatpush2.bf16.msra.mxu0 0
    %232 = vmatprep.mubr.bf16.mxu0 0
    %233 = vmatmul.mubr.bf16.gmra.mxu0 %v195
    %v234 = vpop.f32.mrf.mxu0
    %v235 = vadd.f32 %v180, %v234
    %v236 = vpop.f32.mrf.mxu0
    %v237 = vpop.f32.mrf.mxu0
    %v238 = vadd.f32 %v180, %v237
    %v239 = vpop.f32.mrf.mxu0
    %240 = vmatprep.mubr.bf16.mxu0 0
    %241 = vmatmul.mubr.bf16.gmra.mxu0 %v198
    %v242 = vpop.f32.mrf.mxu0
    %v243 = vadd.f32 %v180, %v242
    %v244 = vpop.f32.mrf.mxu0
    %v245 = vpop.f32.mrf.mxu0
    %v246 = vadd.f32 %v180, %v245
    %v247 = vpop.f32.mrf.mxu0
    %248 = vdwg.mxu0
    %v249 = vpack.c.bf16 %v238, %v235
    %v250 = vpack.c.bf16 %v246, %v243
    %v253 = vunpack.c.l.b16 %v249
    %v254 = vunpack.c.h.b16 %v249
    %v255 = vunpack.c.l.b16 %v250
    %v256 = vunpack.c.h.b16 %v250
    %v257 = vpack.c.b16 %v253, %v253
    %v258 = vpack.c.b16 %v254, %v254
    %v259 = vpack.c.b16 %v255, %v255
    %v260 = vpack.c.b16 %v256, %v256
    %261 = vrot.lane.b32.xlu0 %v257, 96
    %v262 = vpop.permute.xlu0 %261
    %vm263 = vcmask 64512
    %v265 = vsel %vm263, %v257, 0
    %v268 = vsel %vm263, %v262, 0
    %270 = vmatprep.subr.bf16.mxu0 0
    %271 = vmatpush1.bf16.xpose.msra.mxu0 0
    %272 = vmatprep.subr.bf16.mxu0 0
    %273 = vmatpush1.bf16.xpose.msra.mxu0 0
    %274 = vmatprep.subr.bf16.mxu0 0
    %275 = vmatpush1.bf16.xpose.msra.mxu0 0
    %276 = vmatprep.subr.bf16.mxu0 0
    %277 = vmatpush1.bf16.xpose.msra.mxu0 0
    %278 = vmatprep.subr.bf16.mxu0 0
    %279 = vmatpush1.bf16.xpose.msra.mxu0 0
    %280 = vmatprep.subr.bf16.mxu0 0
    %281 = vmatpush1.bf16.xpose.msra.mxu0 0
    %282 = vmatprep.subr.bf16.mxu0 0
    %283 = vmatpush1.bf16.xpose.msra.mxu0 0
    %284 = vmatprep.subr.bf16.mxu0 0
    %285 = vmatpush1.bf16.xpose.msra.mxu0 %v268
    %286 = vmatprep.subr.bf16.mxu0 0
    %287 = vmatpush2.bf16.xpose.msra.mxu0 0
    %288 = vmatprep.subr.bf16.mxu0 0
    %289 = vmatpush2.bf16.xpose.msra.mxu0 0
    %290 = vmatprep.subr.bf16.mxu0 0
    %291 = vmatpush2.bf16.xpose.msra.mxu0 0
    %292 = vmatprep.subr.bf16.mxu0 0
    %293 = vmatpush2.bf16.xpose.msra.mxu0 0
    %294 = vmatprep.subr.bf16.mxu0 0
    %295 = vmatpush2.bf16.xpose.msra.mxu0 0
    %296 = vmatprep.subr.bf16.mxu0 0
    %297 = vmatpush2.bf16.xpose.msra.mxu0 0
    %298 = vmatprep.subr.bf16.mxu0 0
    %299 = vmatpush2.bf16.xpose.msra.mxu0 0
    %300 = vmatprep.subr.bf16.mxu0 0
    %301 = vmatpush2.bf16.xpose.msra.mxu0 0
    %302 = vmatprep.mubr.bf16.mxu0 0
    %303 = vmatmul.mubr.bf16.gmra.mxu0 %v265
    %v304 = vpop.f32.mrf.mxu0
    %v305 = vadd.f32 0.0, %v304
    %v306 = vpop.f32.mrf.mxu0
    %v307 = vpop.f32.mrf.mxu0
    %v308 = vpop.f32.mrf.mxu0
    %309 = vdwg.mxu0
    %310 = vrot.lane.b32.xlu0 %v258, 96
    %v311 = vpop.permute.xlu0 %310
    %v313 = vsel %vm263, %v258, 0
    %v316 = vsel %vm263, %v311, 0
    %318 = vmatprep.subr.bf16.mxu0 0
    %319 = vmatpush1.bf16.xpose.msra.mxu0 0
    %320 = vmatprep.subr.bf16.mxu0 0
    %321 = vmatpush1.bf16.xpose.msra.mxu0 0
    %322 = vmatprep.subr.bf16.mxu0 0
    %323 = vmatpush1.bf16.xpose.msra.mxu0 0
    %324 = vmatprep.subr.bf16.mxu0 0
    %325 = vmatpush1.bf16.xpose.msra.mxu0 0
    %326 = vmatprep.subr.bf16.mxu0 0
    %327 = vmatpush1.bf16.xpose.msra.mxu0 0
    %328 = vmatprep.subr.bf16.mxu0 0
    %329 = vmatpush1.bf16.xpose.msra.mxu0 0
    %330 = vmatprep.subr.bf16.mxu0 0
    %331 = vmatpush1.bf16.xpose.msra.mxu0 0
    %332 = vmatprep.subr.bf16.mxu0 0
    %333 = vmatpush1.bf16.xpose.msra.mxu0 %v316
    %334 = vmatprep.subr.bf16.mxu0 0
    %335 = vmatpush2.bf16.xpose.msra.mxu0 0
    %336 = vmatprep.subr.bf16.mxu0 0
    %337 = vmatpush2.bf16.xpose.msra.mxu0 0
    %338 = vmatprep.subr.bf16.mxu0 0
    %339 = vmatpush2.bf16.xpose.msra.mxu0 0
    %340 = vmatprep.subr.bf16.mxu0 0
    %341 = vmatpush2.bf16.xpose.msra.mxu0 0
    %342 = vmatprep.subr.bf16.mxu0 0
    %343 = vmatpush2.bf16.xpose.msra.mxu0 0
    %344 = vmatprep.subr.bf16.mxu0 0
    %345 = vmatpush2.bf16.xpose.msra.mxu0 0
    %346 = vmatprep.subr.bf16.mxu0 0
    %347 = vmatpush2.bf16.xpose.msra.mxu0 0
    %348 = vmatprep.subr.bf16.mxu0 0
    %349 = vmatpush2.bf16.xpose.msra.mxu0 0
    %350 = vmatprep.mubr.bf16.mxu0 0
    %351 = vmatmul.mubr.bf16.gmra.mxu0 %v313
    %v352 = vpop.f32.mrf.mxu0
    %v353 = vadd.f32 0.0, %v352
    %v354 = vpop.f32.mrf.mxu0
    %v355 = vpop.f32.mrf.mxu0
    %v356 = vpop.f32.mrf.mxu0
    %357 = vdwg.mxu0
    %358 = vrot.lane.b32.xlu0 %v259, 96
    %v359 = vpop.permute.xlu0 %358
    %v361 = vsel %vm263, %v259, 0
    %v364 = vsel %vm263, %v359, 0
    %366 = vmatprep.subr.bf16.mxu0 0
    %367 = vmatpush1.bf16.xpose.msra.mxu0 0
    %368 = vmatprep.subr.bf16.mxu0 0
    %369 = vmatpush1.bf16.xpose.msra.mxu0 0
    %370 = vmatprep.subr.bf16.mxu0 0
    %371 = vmatpush1.bf16.xpose.msra.mxu0 0
    %372 = vmatprep.subr.bf16.mxu0 0
    %373 = vmatpush1.bf16.xpose.msra.mxu0 0
    %374 = vmatprep.subr.bf16.mxu0 0
    %375 = vmatpush1.bf16.xpose.msra.mxu0 0
    %376 = vmatprep.subr.bf16.mxu0 0
    %377 = vmatpush1.bf16.xpose.msra.mxu0 0
    %378 = vmatprep.subr.bf16.mxu0 0
    %379 = vmatpush1.bf16.xpose.msra.mxu0 0
    %380 = vmatprep.subr.bf16.mxu0 0
    %381 = vmatpush1.bf16.xpose.msra.mxu0 %v364
    %382 = vmatprep.subr.bf16.mxu0 0
    %383 = vmatpush2.bf16.xpose.msra.mxu0 0
    %384 = vmatprep.subr.bf16.mxu0 0
    %385 = vmatpush2.bf16.xpose.msra.mxu0 0
    %386 = vmatprep.subr.bf16.mxu0 0
    %387 = vmatpush2.bf16.xpose.msra.mxu0 0
    %388 = vmatprep.subr.bf16.mxu0 0
    %389 = vmatpush2.bf16.xpose.msra.mxu0 0
    %390 = vmatprep.subr.bf16.mxu0 0
    %391 = vmatpush2.bf16.xpose.msra.mxu0 0
    %392 = vmatprep.subr.bf16.mxu0 0
    %393 = vmatpush2.bf16.xpose.msra.mxu0 0
    %394 = vmatprep.subr.bf16.mxu0 0
    %395 = vmatpush2.bf16.xpose.msra.mxu0 0
    %396 = vmatprep.subr.bf16.mxu0 0
    %397 = vmatpush2.bf16.xpose.msra.mxu0 0
    %398 = vmatprep.mubr.bf16.mxu0 0
    %399 = vmatmul.mubr.bf16.gmra.mxu0 %v361
    %v400 = vpop.f32.mrf.mxu0
    %v401 = vadd.f32 0.0, %v400
    %v402 = vpop.f32.mrf.mxu0
    %v403 = vpop.f32.mrf.mxu0
    %v404 = vpop.f32.mrf.mxu0
    %405 = vdwg.mxu0
    %406 = vrot.lane.b32.xlu0 %v260, 96
    %v407 = vpop.permute.xlu0 %406
    %v409 = vsel %vm263, %v260, 0
    %v412 = vsel %vm263, %v407, 0
    %414 = vmatprep.subr.bf16.mxu0 0
    %415 = vmatpush1.bf16.xpose.msra.mxu0 0
    %416 = vmatprep.subr.bf16.mxu0 0
    %417 = vmatpush1.bf16.xpose.msra.mxu0 0
    %418 = vmatprep.subr.bf16.mxu0 0
    %419 = vmatpush1.bf16.xpose.msra.mxu0 0
    %420 = vmatprep.subr.bf16.mxu0 0
    %421 = vmatpush1.bf16.xpose.msra.mxu0 0
    %422 = vmatprep.subr.bf16.mxu0 0
    %423 = vmatpush1.bf16.xpose.msra.mxu0 0
    %424 = vmatprep.subr.bf16.mxu0 0
    %425 = vmatpush1.bf16.xpose.msra.mxu0 0
    %426 = vmatprep.subr.bf16.mxu0 0
    %427 = vmatpush1.bf16.xpose.msra.mxu0 0
    %428 = vmatprep.subr.bf16.mxu0 0
    %429 = vmatpush1.bf16.xpose.msra.mxu0 %v412
    %430 = vmatprep.subr.bf16.mxu0 0
    %431 = vmatpush2.bf16.xpose.msra.mxu0 0
    %432 = vmatprep.subr.bf16.mxu0 0
    %433 = vmatpush2.bf16.xpose.msra.mxu0 0
    %434 = vmatprep.subr.bf16.mxu0 0
    %435 = vmatpush2.bf16.xpose.msra.mxu0 0
    %436 = vmatprep.subr.bf16.mxu0 0
    %437 = vmatpush2.bf16.xpose.msra.mxu0 0
    %438 = vmatprep.subr.bf16.mxu0 0
    %439 = vmatpush2.bf16.xpose.msra.mxu0 0
    %440 = vmatprep.subr.bf16.mxu0 0
    %441 = vmatpush2.bf16.xpose.msra.mxu0 0
    %442 = vmatprep.subr.bf16.mxu0 0
    %443 = vmatpush2.bf16.xpose.msra.mxu0 0
    %444 = vmatprep.subr.bf16.mxu0 0
    %445 = vmatpush2.bf16.xpose.msra.mxu0 0
    %446 = vmatprep.mubr.bf16.mxu0 0
    %447 = vmatmul.mubr.bf16.gmra.mxu0 %v409
    %v448 = vpop.f32.mrf.mxu0
    %v449 = vadd.f32 0.0, %v448
    %v450 = vpop.f32.mrf.mxu0
    %v451 = vpop.f32.mrf.mxu0
    %v452 = vpop.f32.mrf.mxu0
    %453 = vdwg.mxu0
    %v454 = vsel %vm263, %v305, -inf
    %455 = vmax.xlane.f32.xlu0 %v454
    %v456 = vpop.xlane.xlu0 %455
    %v457 = vsel %vm263, %v353, -inf
    %458 = vmax.xlane.f32.xlu0 %v457
    %v459 = vpop.xlane.xlu0 %458
    %v460 = vsel %vm263, %v401, -inf
    %461 = vmax.xlane.f32.xlu0 %v460
    %v462 = vpop.xlane.xlu0 %461
    %v463 = vsel %vm263, %v449, -inf
    %464 = vmax.xlane.f32.xlu0 %v463
    %v465 = vpop.xlane.xlu0 %464
    %v466 = vsub.f32 %v305, %v456
    %v467 = vsub.f32 %v353, %v459
    %v468 = vsub.f32 %v401, %v462
    %v469 = vsub.f32 %v449, %v465
    %v470 = vmul.f32 %v466, 1.442695
    %v471 = vpow.pop %v470
    %v472 = vmul.f32 %v467, 1.442695
    %v473 = vpow.pop %v472
    %v474 = vmul.f32 %v468, 1.442695
    %v475 = vpow.pop %v474
    %v476 = vmul.f32 %v469, 1.442695
    %v477 = vpow.pop %v476
    %v478 = vsel %vm263, %v471, 0.0
    %479 = vadd.xlane.f32.xlu0 %v478
    %v480 = vpop.xlane.xlu0 %479
    %v481 = vsel %vm263, %v473, 0.0
    %482 = vadd.xlane.f32.xlu0 %v481
    %v483 = vpop.xlane.xlu0 %482
    %v484 = vsel %vm263, %v475, 0.0
    %485 = vadd.xlane.f32.xlu0 %v484
    %v486 = vpop.xlane.xlu0 %485
    %v487 = vsel %vm263, %v477, 0.0
    %488 = vadd.xlane.f32.xlu0 %v487
    %v489 = vpop.xlane.xlu0 %488
    %v490 = vrcp.pop %v480
    %v491 = vrcp.pop %v483
    %v492 = vrcp.pop %v486
    %v493 = vrcp.pop %v489
    %v494 = vmul.f32 %v471, %v490
    %v495 = vmul.f32 %v473, %v491
    %v496 = vmul.f32 %v475, %v492
    %v497 = vmul.f32 %v477, %v493
    %v498 = vpack.c.bf16 %v494, %v494
    %v499 = vpack.c.bf16 %v495, %v495
    %v500 = vpack.c.bf16 %v496, %v496
    %v501 = vpack.c.bf16 %v497, %v497
    %502 = vrot.lane.b32.xlu0 %v257, 64
    %v503 = vpop.permute.xlu0 %502
    %v505 = vsel %vm263, %v498, 0
    %vm507 = vcmask 1043456
    %v509 = vsel %vm507, %v503, 0
    %511 = vmatprep.subr.bf16.mxu0 0
    %512 = vmatpush1.bf16.msra.mxu0 0
    %513 = vmatprep.subr.bf16.mxu0 0
    %514 = vmatpush1.bf16.msra.mxu0 0
    %515 = vmatprep.subr.bf16.mxu0 0
    %516 = vmatpush1.bf16.msra.mxu0 0
    %517 = vmatprep.subr.bf16.mxu0 0
    %518 = vmatpush1.bf16.msra.mxu0 0
    %519 = vmatprep.subr.bf16.mxu0 0
    %520 = vmatpush1.bf16.msra.mxu0 0
    %521 = vmatprep.subr.bf16.mxu0 0
    %522 = vmatpush1.bf16.msra.mxu0 0
    %523 = vmatprep.subr.bf16.mxu0 0
    %524 = vmatpush1.bf16.msra.mxu0 0
    %525 = vmatprep.subr.bf16.mxu0 0
    %526 = vmatpush1.bf16.msra.mxu0 %v509
    %527 = vmatprep.subr.bf16.mxu0 0
    %528 = vmatpush2.bf16.msra.mxu0 0
    %529 = vmatprep.subr.bf16.mxu0 0
    %530 = vmatpush2.bf16.msra.mxu0 0
    %531 = vmatprep.subr.bf16.mxu0 0
    %532 = vmatpush2.bf16.msra.mxu0 0
    %533 = vmatprep.subr.bf16.mxu0 0
    %534 = vmatpush2.bf16.msra.mxu0 0
    %535 = vmatprep.subr.bf16.mxu0 0
    %536 = vmatpush2.bf16.msra.mxu0 0
    %537 = vmatprep.subr.bf16.mxu0 0
    %538 = vmatpush2.bf16.msra.mxu0 0
    %539 = vmatprep.subr.bf16.mxu0 0
    %540 = vmatpush2.bf16.msra.mxu0 0
    %541 = vmatprep.subr.bf16.mxu0 0
    %542 = vmatpush2.bf16.msra.mxu0 0
    %543 = vmatprep.mubr.bf16.mxu0 0
    %544 = vmatmul.mubr.bf16.gmra.mxu0 %v505
    %v545 = vpop.f32.mrf.mxu0
    %v546 = vadd.f32 0.0, %v545
    %v547 = vpop.f32.mrf.mxu0
    %v548 = vpop.f32.mrf.mxu0
    %v549 = vpop.f32.mrf.mxu0
    %550 = vdwg.mxu0
    %551 = vrot.lane.b32.xlu0 %v258, 64
    %v552 = vpop.permute.xlu0 %551
    %v554 = vsel %vm263, %v499, 0
    %v557 = vsel %vm507, %v552, 0
    %559 = vmatprep.subr.bf16.mxu0 0
    %560 = vmatpush1.bf16.msra.mxu0 0
    %561 = vmatprep.subr.bf16.mxu0 0
    %562 = vmatpush1.bf16.msra.mxu0 0
    %563 = vmatprep.subr.bf16.mxu0 0
    %564 = vmatpush1.bf16.msra.mxu0 0
    %565 = vmatprep.subr.bf16.mxu0 0
    %566 = vmatpush1.bf16.msra.mxu0 0
    %567 = vmatprep.subr.bf16.mxu0 0
    %568 = vmatpush1.bf16.msra.mxu0 0
    %569 = vmatprep.subr.bf16.mxu0 0
    %570 = vmatpush1.bf16.msra.mxu0 0
    %571 = vmatprep.subr.bf16.mxu0 0
    %572 = vmatpush1.bf16.msra.mxu0 0
    %573 = vmatprep.subr.bf16.mxu0 0
    %574 = vmatpush1.bf16.msra.mxu0 %v557
    %575 = vmatprep.subr.bf16.mxu0 0
    %576 = vmatpush2.bf16.msra.mxu0 0
    %577 = vmatprep.subr.bf16.mxu0 0
    %578 = vmatpush2.bf16.msra.mxu0 0
    %579 = vmatprep.subr.bf16.mxu0 0
    %580 = vmatpush2.bf16.msra.mxu0 0
    %581 = vmatprep.subr.bf16.mxu0 0
    %582 = vmatpush2.bf16.msra.mxu0 0
    %583 = vmatprep.subr.bf16.mxu0 0
    %584 = vmatpush2.bf16.msra.mxu0 0
    %585 = vmatprep.subr.bf16.mxu0 0
    %586 = vmatpush2.bf16.msra.mxu0 0
    %587 = vmatprep.subr.bf16.mxu0 0
    %588 = vmatpush2.bf16.msra.mxu0 0
    %589 = vmatprep.subr.bf16.mxu0 0
    %590 = vmatpush2.bf16.msra.mxu0 0
    %591 = vmatprep.mubr.bf16.mxu0 0
    %592 = vmatmul.mubr.bf16.gmra.mxu0 %v554
    %v593 = vpop.f32.mrf.mxu0
    %v594 = vadd.f32 0.0, %v593
    %v595 = vpop.f32.mrf.mxu0
    %v596 = vpop.f32.mrf.mxu0
    %v597 = vpop.f32.mrf.mxu0
    %598 = vdwg.mxu0
    %599 = vrot.lane.b32.xlu0 %v259, 64
    %v600 = vpop.permute.xlu0 %599
    %v602 = vsel %vm263, %v500, 0
    %v605 = vsel %vm507, %v600, 0
    %607 = vmatprep.subr.bf16.mxu0 0
    %608 = vmatpush1.bf16.msra.mxu0 0
    %609 = vmatprep.subr.bf16.mxu0 0
    %610 = vmatpush1.bf16.msra.mxu0 0
    %611 = vmatprep.subr.bf16.mxu0 0
    %612 = vmatpush1.bf16.msra.mxu0 0
    %613 = vmatprep.subr.bf16.mxu0 0
    %614 = vmatpush1.bf16.msra.mxu0 0
    %615 = vmatprep.subr.bf16.mxu0 0
    %616 = vmatpush1.bf16.msra.mxu0 0
    %617 = vmatprep.subr.bf16.mxu0 0
    %618 = vmatpush1.bf16.msra.mxu0 0
    %619 = vmatprep.subr.bf16.mxu0 0
    %620 = vmatpush1.bf16.msra.mxu0 0
    %621 = vmatprep.subr.bf16.mxu0 0
    %622 = vmatpush1.bf16.msra.mxu0 %v605
    %623 = vmatprep.subr.bf16.mxu0 0
    %624 = vmatpush2.bf16.msra.mxu0 0
    %625 = vmatprep.subr.bf16.mxu0 0
    %626 = vmatpush2.bf16.msra.mxu0 0
    %627 = vmatprep.subr.bf16.mxu0 0
    %628 = vmatpush2.bf16.msra.mxu0 0
    %629 = vmatprep.subr.bf16.mxu0 0
    %630 = vmatpush2.bf16.msra.mxu0 0
    %631 = vmatprep.subr.bf16.mxu0 0
    %632 = vmatpush2.bf16.msra.mxu0 0
    %633 = vmatprep.subr.bf16.mxu0 0
    %634 = vmatpush2.bf16.msra.mxu0 0
    %635 = vmatprep.subr.bf16.mxu0 0
    %636 = vmatpush2.bf16.msra.mxu0 0
    %637 = vmatprep.subr.bf16.mxu0 0
    %638 = vmatpush2.bf16.msra.mxu0 0
    %639 = vmatprep.mubr.bf16.mxu0 0
    %640 = vmatmul.mubr.bf16.gmra.mxu0 %v602
    %v641 = vpop.f32.mrf.mxu0
    %v642 = vadd.f32 0.0, %v641
    %v643 = vpop.f32.mrf.mxu0
    %v644 = vpop.f32.mrf.mxu0
    %v645 = vpop.f32.mrf.mxu0
    %646 = vdwg.mxu0
    %647 = vrot.lane.b32.xlu0 %v260, 64
    %v648 = vpop.permute.xlu0 %647
    %v650 = vsel %vm263, %v501, 0
    %v653 = vsel %vm507, %v648, 0
    %655 = vmatprep.subr.bf16.mxu0 0
    %656 = vmatpush1.bf16.msra.mxu0 0
    %657 = vmatprep.subr.bf16.mxu0 0
    %658 = vmatpush1.bf16.msra.mxu0 0
    %659 = vmatprep.subr.bf16.mxu0 0
    %660 = vmatpush1.bf16.msra.mxu0 0
    %661 = vmatprep.subr.bf16.mxu0 0
    %662 = vmatpush1.bf16.msra.mxu0 0
    %663 = vmatprep.subr.bf16.mxu0 0
    %664 = vmatpush1.bf16.msra.mxu0 0
    %665 = vmatprep.subr.bf16.mxu0 0
    %666 = vmatpush1.bf16.msra.mxu0 0
    %667 = vmatprep.subr.bf16.mxu0 0
    %668 = vmatpush1.bf16.msra.mxu0 0
    %669 = vmatprep.subr.bf16.mxu0 0
    %670 = vmatpush1.bf16.msra.mxu0 %v653
    %671 = vmatprep.subr.bf16.mxu0 0
    %672 = vmatpush2.bf16.msra.mxu0 0
    %673 = vmatprep.subr.bf16.mxu0 0
    %674 = vmatpush2.bf16.msra.mxu0 0
    %675 = vmatprep.subr.bf16.mxu0 0
    %676 = vmatpush2.bf16.msra.mxu0 0
    %677 = vmatprep.subr.bf16.mxu0 0
    %678 = vmatpush2.bf16.msra.mxu0 0
    %679 = vmatprep.subr.bf16.mxu0 0
    %680 = vmatpush2.bf16.msra.mxu0 0
    %681 = vmatprep.subr.bf16.mxu0 0
    %682 = vmatpush2.bf16.msra.mxu0 0
    %683 = vmatprep.subr.bf16.mxu0 0
    %684 = vmatpush2.bf16.msra.mxu0 0
    %685 = vmatprep.subr.bf16.mxu0 0
    %686 = vmatpush2.bf16.msra.mxu0 0
    %687 = vmatprep.mubr.bf16.mxu0 0
    %688 = vmatmul.mubr.bf16.gmra.mxu0 %v650
    %v689 = vpop.f32.mrf.mxu0
    %v690 = vadd.f32 0.0, %v689
    %v691 = vpop.f32.mrf.mxu0
    %v692 = vpop.f32.mrf.mxu0
    %v693 = vpop.f32.mrf.mxu0
    %694 = vdwg.mxu0
    %695 = vrot.lane.b32.xlu0 %v257, 120
    %v696 = vpop.permute.xlu0 %695
    %697 = vrot.lane.b32.xlu0 %v257, 88
    %v698 = vpop.permute.xlu0 %697
    %v700 = vsel %vm263, %v696, 0
    %v703 = vsel %vm263, %v698, 0
    %705 = vmatprep.subr.bf16.mxu0 0
    %706 = vmatpush1.bf16.xpose.msra.mxu0 0
    %707 = vmatprep.subr.bf16.mxu0 0
    %708 = vmatpush1.bf16.xpose.msra.mxu0 0
    %709 = vmatprep.subr.bf16.mxu0 0
    %710 = vmatpush1.bf16.xpose.msra.mxu0 0
    %711 = vmatprep.subr.bf16.mxu0 0
    %712 = vmatpush1.bf16.xpose.msra.mxu0 0
    %713 = vmatprep.subr.bf16.mxu0 0
    %714 = vmatpush1.bf16.xpose.msra.mxu0 0
    %715 = vmatprep.subr.bf16.mxu0 0
    %716 = vmatpush1.bf16.xpose.msra.mxu0 0
    %717 = vmatprep.subr.bf16.mxu0 0
    %718 = vmatpush1.bf16.xpose.msra.mxu0 0
    %719 = vmatprep.subr.bf16.mxu0 0
    %720 = vmatpush1.bf16.xpose.msra.mxu0 %v703
    %721 = vmatprep.subr.bf16.mxu0 0
    %722 = vmatpush2.bf16.xpose.msra.mxu0 0
    %723 = vmatprep.subr.bf16.mxu0 0
    %724 = vmatpush2.bf16.xpose.msra.mxu0 0
    %725 = vmatprep.subr.bf16.mxu0 0
    %726 = vmatpush2.bf16.xpose.msra.mxu0 0
    %727 = vmatprep.subr.bf16.mxu0 0
    %728 = vmatpush2.bf16.xpose.msra.mxu0 0
    %729 = vmatprep.subr.bf16.mxu0 0
    %730 = vmatpush2.bf16.xpose.msra.mxu0 0
    %731 = vmatprep.subr.bf16.mxu0 0
    %732 = vmatpush2.bf16.xpose.msra.mxu0 0
    %733 = vmatprep.subr.bf16.mxu0 0
    %734 = vmatpush2.bf16.xpose.msra.mxu0 0
    %735 = vmatprep.subr.bf16.mxu0 0
    %736 = vmatpush2.bf16.xpose.msra.mxu0 0
    %737 = vmatprep.mubr.bf16.mxu0 0
    %738 = vmatmul.mubr.bf16.gmra.mxu0 %v700
    %v739 = vpop.f32.mrf.mxu0
    %v740 = vadd.f32 0.0, %v739
    %v741 = vpop.f32.mrf.mxu0
    %v742 = vpop.f32.mrf.mxu0
    %v743 = vpop.f32.mrf.mxu0
    %744 = vdwg.mxu0
    %745 = vrot.lane.b32.xlu0 %v258, 120
    %v746 = vpop.permute.xlu0 %745
    %747 = vrot.lane.b32.xlu0 %v258, 88
    %v748 = vpop.permute.xlu0 %747
    %v750 = vsel %vm263, %v746, 0
    %v753 = vsel %vm263, %v748, 0
    %755 = vmatprep.subr.bf16.mxu0 0
    %756 = vmatpush1.bf16.xpose.msra.mxu0 0
    %757 = vmatprep.subr.bf16.mxu0 0
    %758 = vmatpush1.bf16.xpose.msra.mxu0 0
    %759 = vmatprep.subr.bf16.mxu0 0
    %760 = vmatpush1.bf16.xpose.msra.mxu0 0
    %761 = vmatprep.subr.bf16.mxu0 0
    %762 = vmatpush1.bf16.xpose.msra.mxu0 0
    %763 = vmatprep.subr.bf16.mxu0 0
    %764 = vmatpush1.bf16.xpose.msra.mxu0 0
    %765 = vmatprep.subr.bf16.mxu0 0
    %766 = vmatpush1.bf16.xpose.msra.mxu0 0
    %767 = vmatprep.subr.bf16.mxu0 0
    %768 = vmatpush1.bf16.xpose.msra.mxu0 0
    %769 = vmatprep.subr.bf16.mxu0 0
    %770 = vmatpush1.bf16.xpose.msra.mxu0 %v753
    %771 = vmatprep.subr.bf16.mxu0 0
    %772 = vmatpush2.bf16.xpose.msra.mxu0 0
    %773 = vmatprep.subr.bf16.mxu0 0
    %774 = vmatpush2.bf16.xpose.msra.mxu0 0
    %775 = vmatprep.subr.bf16.mxu0 0
    %776 = vmatpush2.bf16.xpose.msra.mxu0 0
    %777 = vmatprep.subr.bf16.mxu0 0
    %778 = vmatpush2.bf16.xpose.msra.mxu0 0
    %779 = vmatprep.subr.bf16.mxu0 0
    %780 = vmatpush2.bf16.xpose.msra.mxu0 0
    %781 = vmatprep.subr.bf16.mxu0 0
    %782 = vmatpush2.bf16.xpose.msra.mxu0 0
    %783 = vmatprep.subr.bf16.mxu0 0
    %784 = vmatpush2.bf16.xpose.msra.mxu0 0
    %785 = vmatprep.subr.bf16.mxu0 0
    %786 = vmatpush2.bf16.xpose.msra.mxu0 0
    %787 = vmatprep.mubr.bf16.mxu0 0
    %788 = vmatmul.mubr.bf16.gmra.mxu0 %v750
    %v789 = vpop.f32.mrf.mxu0
    %v790 = vadd.f32 0.0, %v789
    %v791 = vpop.f32.mrf.mxu0
    %v792 = vpop.f32.mrf.mxu0
    %v793 = vpop.f32.mrf.mxu0
    %794 = vdwg.mxu0
    %795 = vrot.lane.b32.xlu0 %v259, 120
    %v796 = vpop.permute.xlu0 %795
    %797 = vrot.lane.b32.xlu0 %v259, 88
    %v798 = vpop.permute.xlu0 %797
    %v800 = vsel %vm263, %v796, 0
    %v803 = vsel %vm263, %v798, 0
    %805 = vmatprep.subr.bf16.mxu0 0
    %806 = vmatpush1.bf16.xpose.msra.mxu0 0
    %807 = vmatprep.subr.bf16.mxu0 0
    %808 = vmatpush1.bf16.xpose.msra.mxu0 0
    %809 = vmatprep.subr.bf16.mxu0 0
    %810 = vmatpush1.bf16.xpose.msra.mxu0 0
    %811 = vmatprep.subr.bf16.mxu0 0
    %812 = vmatpush1.bf16.xpose.msra.mxu0 0
    %813 = vmatprep.subr.bf16.mxu0 0
    %814 = vmatpush1.bf16.xpose.msra.mxu0 0
    %815 = vmatprep.subr.bf16.mxu0 0
    %816 = vmatpush1.bf16.xpose.msra.mxu0 0
    %817 = vmatprep.subr.bf16.mxu0 0
    %818 = vmatpush1.bf16.xpose.msra.mxu0 0
    %819 = vmatprep.subr.bf16.mxu0 0
    %820 = vmatpush1.bf16.xpose.msra.mxu0 %v803
    %821 = vmatprep.subr.bf16.mxu0 0
    %822 = vmatpush2.bf16.xpose.msra.mxu0 0
    %823 = vmatprep.subr.bf16.mxu0 0
    %824 = vmatpush2.bf16.xpose.msra.mxu0 0
    %825 = vmatprep.subr.bf16.mxu0 0
    %826 = vmatpush2.bf16.xpose.msra.mxu0 0
    %827 = vmatprep.subr.bf16.mxu0 0
    %828 = vmatpush2.bf16.xpose.msra.mxu0 0
    %829 = vmatprep.subr.bf16.mxu0 0
    %830 = vmatpush2.bf16.xpose.msra.mxu0 0
    %831 = vmatprep.subr.bf16.mxu0 0
    %832 = vmatpush2.bf16.xpose.msra.mxu0 0
    %833 = vmatprep.subr.bf16.mxu0 0
    %834 = vmatpush2.bf16.xpose.msra.mxu0 0
    %835 = vmatprep.subr.bf16.mxu0 0
    %836 = vmatpush2.bf16.xpose.msra.mxu0 0
    %837 = vmatprep.mubr.bf16.mxu0 0
    %838 = vmatmul.mubr.bf16.gmra.mxu0 %v800
    %v839 = vpop.f32.mrf.mxu0
    %v840 = vadd.f32 0.0, %v839
    %v841 = vpop.f32.mrf.mxu0
    %v842 = vpop.f32.mrf.mxu0
    %v843 = vpop.f32.mrf.mxu0
    %844 = vdwg.mxu0
    %845 = vrot.lane.b32.xlu0 %v260, 120
    %v846 = vpop.permute.xlu0 %845
    %847 = vrot.lane.b32.xlu0 %v260, 88
    %v848 = vpop.permute.xlu0 %847
    %v850 = vsel %vm263, %v846, 0
    %v853 = vsel %vm263, %v848, 0
    %855 = vmatprep.subr.bf16.mxu0 0
    %856 = vmatpush1.bf16.xpose.msra.mxu0 0
    %857 = vmatprep.subr.bf16.mxu0 0
    %858 = vmatpush1.bf16.xpose.msra.mxu0 0
    %859 = vmatprep.subr.bf16.mxu0 0
    %860 = vmatpush1.bf16.xpose.msra.mxu0 0
    %861 = vmatprep.subr.bf16.mxu0 0
    %862 = vmatpush1.bf16.xpose.msra.mxu0 0
    %863 = vmatprep.subr.bf16.mxu0 0
    %864 = vmatpush1.bf16.xpose.msra.mxu0 0
    %865 = vmatprep.subr.bf16.mxu0 0
    %866 = vmatpush1.bf16.xpose.msra.mxu0 0
    %867 = vmatprep.subr.bf16.mxu0 0
    %868 = vmatpush1.bf16.xpose.msra.mxu0 0
    %869 = vmatprep.subr.bf16.mxu0 0
    %870 = vmatpush1.bf16.xpose.msra.mxu0 %v853
    %871 = vmatprep.subr.bf16.mxu0 0
    %872 = vmatpush2.bf16.xpose.msra.mxu0 0
    %873 = vmatprep.subr.bf16.mxu0 0
    %874 = vmatpush2.bf16.xpose.msra.mxu0 0
    %875 = vmatprep.subr.bf16.mxu0 0
    %876 = vmatpush2.bf16.xpose.msra.mxu0 0
    %877 = vmatprep.subr.bf16.mxu0 0
    %878 = vmatpush2.bf16.xpose.msra.mxu0 0
    %879 = vmatprep.subr.bf16.mxu0 0
    %880 = vmatpush2.bf16.xpose.msra.mxu0 0
    %881 = vmatprep.subr.bf16.mxu0 0
    %882 = vmatpush2.bf16.xpose.msra.mxu0 0
    %883 = vmatprep.subr.bf16.mxu0 0
    %884 = vmatpush2.bf16.xpose.msra.mxu0 0
    %885 = vmatprep.subr.bf16.mxu0 0
    %886 = vmatpush2.bf16.xpose.msra.mxu0 0
    %887 = vmatprep.mubr.bf16.mxu0 0
    %888 = vmatmul.mubr.bf16.gmra.mxu0 %v850
    %v889 = vpop.f32.mrf.mxu0
    %v890 = vadd.f32 0.0, %v889
    %v891 = vpop.f32.mrf.mxu0
    %v892 = vpop.f32.mrf.mxu0
    %v893 = vpop.f32.mrf.mxu0
    %894 = vdwg.mxu0
    %v895 = vsel %vm263, %v740, -inf
    %896 = vmax.xlane.f32.xlu0 %v895
    %v897 = vpop.xlane.xlu0 %896
    %v898 = vsel %vm263, %v790, -inf
    %899 = vmax.xlane.f32.xlu0 %v898
    %v900 = vpop.xlane.xlu0 %899
    %v901 = vsel %vm263, %v840, -inf
    %902 = vmax.xlane.f32.xlu0 %v901
    %v903 = vpop.xlane.xlu0 %902
    %v904 = vsel %vm263, %v890, -inf
    %905 = vmax.xlane.f32.xlu0 %v904
    %v906 = vpop.xlane.xlu0 %905
    %v907 = vsub.f32 %v740, %v897
    %v908 = vsub.f32 %v790, %v900
    %v909 = vsub.f32 %v840, %v903
    %v910 = vsub.f32 %v890, %v906
    %v911 = vmul.f32 %v907, 1.442695
    %v912 = vpow.pop %v911
    %v913 = vmul.f32 %v908, 1.442695
    %v914 = vpow.pop %v913
    %v915 = vmul.f32 %v909, 1.442695
    %v916 = vpow.pop %v915
    %v917 = vmul.f32 %v910, 1.442695
    %v918 = vpow.pop %v917
    %v919 = vsel %vm263, %v912, 0.0
    %920 = vadd.xlane.f32.xlu0 %v919
    %v921 = vpop.xlane.xlu0 %920
    %v922 = vsel %vm263, %v914, 0.0
    %923 = vadd.xlane.f32.xlu0 %v922
    %v924 = vpop.xlane.xlu0 %923
    %v925 = vsel %vm263, %v916, 0.0
    %926 = vadd.xlane.f32.xlu0 %v925
    %v927 = vpop.xlane.xlu0 %926
    %v928 = vsel %vm263, %v918, 0.0
    %929 = vadd.xlane.f32.xlu0 %v928
    %v930 = vpop.xlane.xlu0 %929
    %v931 = vrcp.pop %v921
    %v932 = vrcp.pop %v924
    %v933 = vrcp.pop %v927
    %v934 = vrcp.pop %v930
    %v935 = vmul.f32 %v912, %v931
    %v936 = vmul.f32 %v914, %v932
    %v937 = vmul.f32 %v916, %v933
    %v938 = vmul.f32 %v918, %v934
    %v939 = vpack.c.bf16 %v935, %v935
    %v940 = vpack.c.bf16 %v936, %v936
    %v941 = vpack.c.bf16 %v937, %v937
    %v942 = vpack.c.bf16 %v938, %v938
    %943 = vrot.lane.b32.xlu0 %v257, 56
    %v944 = vpop.permute.xlu0 %943
    %v946 = vsel %vm263, %v939, 0
    %v949 = vsel %vm507, %v944, 0
    %951 = vmatprep.subr.bf16.mxu0 0
    %952 = vmatpush1.bf16.msra.mxu0 0
    %953 = vmatprep.subr.bf16.mxu0 0
    %954 = vmatpush1.bf16.msra.mxu0 0
    %955 = vmatprep.subr.bf16.mxu0 0
    %956 = vmatpush1.bf16.msra.mxu0 0
    %957 = vmatprep.subr.bf16.mxu0 0
    %958 = vmatpush1.bf16.msra.mxu0 0
    %959 = vmatprep.subr.bf16.mxu0 0
    %960 = vmatpush1.bf16.msra.mxu0 0
    %961 = vmatprep.subr.bf16.mxu0 0
    %962 = vmatpush1.bf16.msra.mxu0 0
    %963 = vmatprep.subr.bf16.mxu0 0
    %964 = vmatpush1.bf16.msra.mxu0 0
    %965 = vmatprep.subr.bf16.mxu0 0
    %966 = vmatpush1.bf16.msra.mxu0 %v949
    %967 = vmatprep.subr.bf16.mxu0 0
    %968 = vmatpush2.bf16.msra.mxu0 0
    %969 = vmatprep.subr.bf16.mxu0 0
    %970 = vmatpush2.bf16.msra.mxu0 0
    %971 = vmatprep.subr.bf16.mxu0 0
    %972 = vmatpush2.bf16.msra.mxu0 0
    %973 = vmatprep.subr.bf16.mxu0 0
    %974 = vmatpush2.bf16.msra.mxu0 0
    %975 = vmatprep.subr.bf16.mxu0 0
    %976 = vmatpush2.bf16.msra.mxu0 0
    %977 = vmatprep.subr.bf16.mxu0 0
    %978 = vmatpush2.bf16.msra.mxu0 0
    %979 = vmatprep.subr.bf16.mxu0 0
    %980 = vmatpush2.bf16.msra.mxu0 0
    %981 = vmatprep.subr.bf16.mxu0 0
    %982 = vmatpush2.bf16.msra.mxu0 0
    %983 = vmatprep.mubr.bf16.mxu0 0
    %984 = vmatmul.mubr.bf16.gmra.mxu0 %v946
    %v985 = vpop.f32.mrf.mxu0
    %v986 = vadd.f32 0.0, %v985
    %v987 = vpop.f32.mrf.mxu0
    %v988 = vpop.f32.mrf.mxu0
    %v989 = vpop.f32.mrf.mxu0
    %990 = vdwg.mxu0
    %991 = vrot.lane.b32.xlu0 %v258, 56
    %v992 = vpop.permute.xlu0 %991
    %v994 = vsel %vm263, %v940, 0
    %v997 = vsel %vm507, %v992, 0
    %999 = vmatprep.subr.bf16.mxu0 0
    %1000 = vmatpush1.bf16.msra.mxu0 0
    %1001 = vmatprep.subr.bf16.mxu0 0
    %1002 = vmatpush1.bf16.msra.mxu0 0
    %1003 = vmatprep.subr.bf16.mxu0 0
    %1004 = vmatpush1.bf16.msra.mxu0 0
    %1005 = vmatprep.subr.bf16.mxu0 0
    %1006 = vmatpush1.bf16.msra.mxu0 0
    %1007 = vmatprep.subr.bf16.mxu0 0
    %1008 = vmatpush1.bf16.msra.mxu0 0
    %1009 = vmatprep.subr.bf16.mxu0 0
    %1010 = vmatpush1.bf16.msra.mxu0 0
    %1011 = vmatprep.subr.bf16.mxu0 0
    %1012 = vmatpush1.bf16.msra.mxu0 0
    %1013 = vmatprep.subr.bf16.mxu0 0
    %1014 = vmatpush1.bf16.msra.mxu0 %v997
    %1015 = vmatprep.subr.bf16.mxu0 0
    %1016 = vmatpush2.bf16.msra.mxu0 0
    %1017 = vmatprep.subr.bf16.mxu0 0
    %1018 = vmatpush2.bf16.msra.mxu0 0
    %1019 = vmatprep.subr.bf16.mxu0 0
    %1020 = vmatpush2.bf16.msra.mxu0 0
    %1021 = vmatprep.subr.bf16.mxu0 0
    %1022 = vmatpush2.bf16.msra.mxu0 0
    %1023 = vmatprep.subr.bf16.mxu0 0
    %1024 = vmatpush2.bf16.msra.mxu0 0
    %1025 = vmatprep.subr.bf16.mxu0 0
    %1026 = vmatpush2.bf16.msra.mxu0 0
    %1027 = vmatprep.subr.bf16.mxu0 0
    %1028 = vmatpush2.bf16.msra.mxu0 0
    %1029 = vmatprep.subr.bf16.mxu0 0
    %1030 = vmatpush2.bf16.msra.mxu0 0
    %1031 = vmatprep.mubr.bf16.mxu0 0
    %1032 = vmatmul.mubr.bf16.gmra.mxu0 %v994
    %v1033 = vpop.f32.mrf.mxu0
    %v1034 = vadd.f32 0.0, %v1033
    %v1035 = vpop.f32.mrf.mxu0
    %v1036 = vpop.f32.mrf.mxu0
    %v1037 = vpop.f32.mrf.mxu0
    %1038 = vdwg.mxu0
    %1039 = vrot.lane.b32.xlu0 %v259, 56
    %v1040 = vpop.permute.xlu0 %1039
    %v1042 = vsel %vm263, %v941, 0
    %v1045 = vsel %vm507, %v1040, 0
    %1047 = vmatprep.subr.bf16.mxu0 0
    %1048 = vmatpush1.bf16.msra.mxu0 0
    %1049 = vmatprep.subr.bf16.mxu0 0
    %1050 = vmatpush1.bf16.msra.mxu0 0
    %1051 = vmatprep.subr.bf16.mxu0 0
    %1052 = vmatpush1.bf16.msra.mxu0 0
    %1053 = vmatprep.subr.bf16.mxu0 0
    %1054 = vmatpush1.bf16.msra.mxu0 0
    %1055 = vmatprep.subr.bf16.mxu0 0
    %1056 = vmatpush1.bf16.msra.mxu0 0
    %1057 = vmatprep.subr.bf16.mxu0 0
    %1058 = vmatpush1.bf16.msra.mxu0 0
    %1059 = vmatprep.subr.bf16.mxu0 0
    %1060 = vmatpush1.bf16.msra.mxu0 0
    %1061 = vmatprep.subr.bf16.mxu0 0
    %1062 = vmatpush1.bf16.msra.mxu0 %v1045
    %1063 = vmatprep.subr.bf16.mxu0 0
    %1064 = vmatpush2.bf16.msra.mxu0 0
    %1065 = vmatprep.subr.bf16.mxu0 0
    %1066 = vmatpush2.bf16.msra.mxu0 0
    %1067 = vmatprep.subr.bf16.mxu0 0
    %1068 = vmatpush2.bf16.msra.mxu0 0
    %1069 = vmatprep.subr.bf16.mxu0 0
    %1070 = vmatpush2.bf16.msra.mxu0 0
    %1071 = vmatprep.subr.bf16.mxu0 0
    %1072 = vmatpush2.bf16.msra.mxu0 0
    %1073 = vmatprep.subr.bf16.mxu0 0
    %1074 = vmatpush2.bf16.msra.mxu0 0
    %1075 = vmatprep.subr.bf16.mxu0 0
    %1076 = vmatpush2.bf16.msra.mxu0 0
    %1077 = vmatprep.subr.bf16.mxu0 0
    %1078 = vmatpush2.bf16.msra.mxu0 0
    %1079 = vmatprep.mubr.bf16.mxu0 0
    %1080 = vmatmul.mubr.bf16.gmra.mxu0 %v1042
    %v1081 = vpop.f32.mrf.mxu0
    %v1082 = vadd.f32 0.0, %v1081
    %v1083 = vpop.f32.mrf.mxu0
    %v1084 = vpop.f32.mrf.mxu0
    %v1085 = vpop.f32.mrf.mxu0
    %1086 = vdwg.mxu0
    %1087 = vrot.lane.b32.xlu0 %v260, 56
    %v1088 = vpop.permute.xlu0 %1087
    %v1090 = vsel %vm263, %v942, 0
    %v1093 = vsel %vm507, %v1088, 0
    %1095 = vmatprep.subr.bf16.mxu0 0
    %1096 = vmatpush1.bf16.msra.mxu0 0
    %1097 = vmatprep.subr.bf16.mxu0 0
    %1098 = vmatpush1.bf16.msra.mxu0 0
    %1099 = vmatprep.subr.bf16.mxu0 0
    %1100 = vmatpush1.bf16.msra.mxu0 0
    %1101 = vmatprep.subr.bf16.mxu0 0
    %1102 = vmatpush1.bf16.msra.mxu0 0
    %1103 = vmatprep.subr.bf16.mxu0 0
    %1104 = vmatpush1.bf16.msra.mxu0 0
    %1105 = vmatprep.subr.bf16.mxu0 0
    %1106 = vmatpush1.bf16.msra.mxu0 0
    %1107 = vmatprep.subr.bf16.mxu0 0
    %1108 = vmatpush1.bf16.msra.mxu0 0
    %1109 = vmatprep.subr.bf16.mxu0 0
    %1110 = vmatpush1.bf16.msra.mxu0 %v1093
    %1111 = vmatprep.subr.bf16.mxu0 0
    %1112 = vmatpush2.bf16.msra.mxu0 0
    %1113 = vmatprep.subr.bf16.mxu0 0
    %1114 = vmatpush2.bf16.msra.mxu0 0
    %1115 = vmatprep.subr.bf16.mxu0 0
    %1116 = vmatpush2.bf16.msra.mxu0 0
    %1117 = vmatprep.subr.bf16.mxu0 0
    %1118 = vmatpush2.bf16.msra.mxu0 0
    %1119 = vmatprep.subr.bf16.mxu0 0
    %1120 = vmatpush2.bf16.msra.mxu0 0
    %1121 = vmatprep.subr.bf16.mxu0 0
    %1122 = vmatpush2.bf16.msra.mxu0 0
    %1123 = vmatprep.subr.bf16.mxu0 0
    %1124 = vmatpush2.bf16.msra.mxu0 0
    %1125 = vmatprep.subr.bf16.mxu0 0
    %1126 = vmatpush2.bf16.msra.mxu0 0
    %1127 = vmatprep.mubr.bf16.mxu0 0
    %1128 = vmatmul.mubr.bf16.gmra.mxu0 %v1090
    %v1129 = vpop.f32.mrf.mxu0
    %v1130 = vadd.f32 0.0, %v1129
    %v1131 = vpop.f32.mrf.mxu0
    %v1132 = vpop.f32.mrf.mxu0
    %v1133 = vpop.f32.mrf.mxu0
    %1134 = vdwg.mxu0
    %1135 = vrot.lane.b32.xlu0 %v257, 112
    %v1136 = vpop.permute.xlu0 %1135
    %1137 = vrot.lane.b32.xlu0 %v257, 80
    %v1138 = vpop.permute.xlu0 %1137
    %v1140 = vsel %vm263, %v1136, 0
    %v1143 = vsel %vm263, %v1138, 0
    %1145 = vmatprep.subr.bf16.mxu0 0
    %1146 = vmatpush1.bf16.xpose.msra.mxu0 0
    %1147 = vmatprep.subr.bf16.mxu0 0
    %1148 = vmatpush1.bf16.xpose.msra.mxu0 0
    %1149 = vmatprep.subr.bf16.mxu0 0
    %1150 = vmatpush1.bf16.xpose.msra.mxu0 0
    %1151 = vmatprep.subr.bf16.mxu0 0
    %1152 = vmatpush1.bf16.xpose.msra.mxu0 0
    %1153 = vmatprep.subr.bf16.mxu0 0
    %1154 = vmatpush1.bf16.xpose.msra.mxu0 0
    %1155 = vmatprep.subr.bf16.mxu0 0
    %1156 = vmatpush1.bf16.xpose.msra.mxu0 0
    %1157 = vmatprep.subr.bf16.mxu0 0
    %1158 = vmatpush1.bf16.xpose.msra.mxu0 0
    %1159 = vmatprep.subr.bf16.mxu0 0
    %1160 = vmatpush1.bf16.xpose.msra.mxu0 %v1143
    %1161 = vmatprep.subr.bf16.mxu0 0
    %1162 = vmatpush2.bf16.xpose.msra.mxu0 0
    %1163 = vmatprep.subr.bf16.mxu0 0
    %1164 = vmatpush2.bf16.xpose.msra.mxu0 0
    %1165 = vmatprep.subr.bf16.mxu0 0
    %1166 = vmatpush2.bf16.xpose.msra.mxu0 0
    %1167 = vmatprep.subr.bf16.mxu0 0
    %1168 = vmatpush2.bf16.xpose.msra.mxu0 0
    %1169 = vmatprep.subr.bf16.mxu0 0
    %1170 = vmatpush2.bf16.xpose.msra.mxu0 0
    %1171 = vmatprep.subr.bf16.mxu0 0
    %1172 = vmatpush2.bf16.xpose.msra.mxu0 0
    %1173 = vmatprep.subr.bf16.mxu0 0
    %1174 = vmatpush2.bf16.xpose.msra.mxu0 0
    %1175 = vmatprep.subr.bf16.mxu0 0
    %1176 = vmatpush2.bf16.xpose.msra.mxu0 0
    %1177 = vmatprep.mubr.bf16.mxu0 0
    %1178 = vmatmul.mubr.bf16.gmra.mxu0 %v1140
    %v1179 = vpop.f32.mrf.mxu0
    %v1180 = vadd.f32 0.0, %v1179
    %v1181 = vpop.f32.mrf.mxu0
    %v1182 = vpop.f32.mrf.mxu0
    %v1183 = vpop.f32.mrf.mxu0
    %1184 = vdwg.mxu0
    %1185 = vrot.lane.b32.xlu0 %v258, 112
    %v1186 = vpop.permute.xlu0 %1185
    %1187 = vrot.lane.b32.xlu0 %v258, 80
    %v1188 = vpop.permute.xlu0 %1187
    %v1190 = vsel %vm263, %v1186, 0
    %v1193 = vsel %vm263, %v1188, 0
    %1195 = vmatprep.subr.bf16.mxu0 0
    %1196 = vmatpush1.bf16.xpose.msra.mxu0 0
    %1197 = vmatprep.subr.bf16.mxu0 0
    %1198 = vmatpush1.bf16.xpose.msra.mxu0 0
    %1199 = vmatprep.subr.bf16.mxu0 0
    %1200 = vmatpush1.bf16.xpose.msra.mxu0 0
    %1201 = vmatprep.subr.bf16.mxu0 0
    %1202 = vmatpush1.bf16.xpose.msra.mxu0 0
    %1203 = vmatprep.subr.bf16.mxu0 0
    %1204 = vmatpush1.bf16.xpose.msra.mxu0 0
    %1205 = vmatprep.subr.bf16.mxu0 0
    %1206 = vmatpush1.bf16.xpose.msra.mxu0 0
    %1207 = vmatprep.subr.bf16.mxu0 0
    %1208 = vmatpush1.bf16.xpose.msra.mxu0 0
    %1209 = vmatprep.subr.bf16.mxu0 0
    %1210 = vmatpush1.bf16.xpose.msra.mxu0 %v1193
    %1211 = vmatprep.subr.bf16.mxu0 0
    %1212 = vmatpush2.bf16.xpose.msra.mxu0 0
    %1213 = vmatprep.subr.bf16.mxu0 0
    %1214 = vmatpush2.bf16.xpose.msra.mxu0 0
    %1215 = vmatprep.subr.bf16.mxu0 0
    %1216 = vmatpush2.bf16.xpose.msra.mxu0 0
    %1217 = vmatprep.subr.bf16.mxu0 0
    %1218 = vmatpush2.bf16.xpose.msra.mxu0 0
    %1219 = vmatprep.subr.bf16.mxu0 0
    %1220 = vmatpush2.bf16.xpose.msra.mxu0 0
    %1221 = vmatprep.subr.bf16.mxu0 0
    %1222 = vmatpush2.bf16.xpose.msra.mxu0 0
    %1223 = vmatprep.subr.bf16.mxu0 0
    %1224 = vmatpush2.bf16.xpose.msra.mxu0 0
    %1225 = vmatprep.subr.bf16.mxu0 0
    %1226 = vmatpush2.bf16.xpose.msra.mxu0 0
    %1227 = vmatprep.mubr.bf16.mxu0 0
    %1228 = vmatmul.mubr.bf16.gmra.mxu0 %v1190
    %v1229 = vpop.f32.mrf.mxu0
    %v1230 = vadd.f32 0.0, %v1229
    %v1231 = vpop.f32.mrf.mxu0
    %v1232 = vpop.f32.mrf.mxu0
    %v1233 = vpop.f32.mrf.mxu0
    %1234 = vdwg.mxu0
    %1235 = vrot.lane.b32.xlu0 %v259, 112
    %v1236 = vpop.permute.xlu0 %1235
    %1237 = vrot.lane.b32.xlu0 %v259, 80
    %v1238 = vpop.permute.xlu0 %1237
    %v1240 = vsel %vm263, %v1236, 0
    %v1243 = vsel %vm263, %v1238, 0
    %1245 = vmatprep.subr.bf16.mxu0 0
    %1246 = vmatpush1.bf16.xpose.msra.mxu0 0
    %1247 = vmatprep.subr.bf16.mxu0 0
    %1248 = vmatpush1.bf16.xpose.msra.mxu0 0
    %1249 = vmatprep.subr.bf16.mxu0 0
    %1250 = vmatpush1.bf16.xpose.msra.mxu0 0
    %1251 = vmatprep.subr.bf16.mxu0 0
    %1252 = vmatpush1.bf16.xpose.msra.mxu0 0
    %1253 = vmatprep.subr.bf16.mxu0 0
    %1254 = vmatpush1.bf16.xpose.msra.mxu0 0
    %1255 = vmatprep.subr.bf16.mxu0 0
    %1256 = vmatpush1.bf16.xpose.msra.mxu0 0
    %1257 = vmatprep.subr.bf16.mxu0 0
    %1258 = vmatpush1.bf16.xpose.msra.mxu0 0
    %1259 = vmatprep.subr.bf16.mxu0 0
    %1260 = vmatpush1.bf16.xpose.msra.mxu0 %v1243
    %1261 = vmatprep.subr.bf16.mxu0 0
    %1262 = vmatpush2.bf16.xpose.msra.mxu0 0
    %1263 = vmatprep.subr.bf16.mxu0 0
    %1264 = vmatpush2.bf16.xpose.msra.mxu0 0
    %1265 = vmatprep.subr.bf16.mxu0 0
    %1266 = vmatpush2.bf16.xpose.msra.mxu0 0
    %1267 = vmatprep.subr.bf16.mxu0 0
    %1268 = vmatpush2.bf16.xpose.msra.mxu0 0
    %1269 = vmatprep.subr.bf16.mxu0 0
    %1270 = vmatpush2.bf16.xpose.msra.mxu0 0
    %1271 = vmatprep.subr.bf16.mxu0 0
    %1272 = vmatpush2.bf16.xpose.msra.mxu0 0
    %1273 = vmatprep.subr.bf16.mxu0 0
    %1274 = vmatpush2.bf16.xpose.msra.mxu0 0
    %1275 = vmatprep.subr.bf16.mxu0 0
    %1276 = vmatpush2.bf16.xpose.msra.mxu0 0
    %1277 = vmatprep.mubr.bf16.mxu0 0
    %1278 = vmatmul.mubr.bf16.gmra.mxu0 %v1240
    %v1279 = vpop.f32.mrf.mxu0
    %v1280 = vadd.f32 0.0, %v1279
    %v1281 = vpop.f32.mrf.mxu0
    %v1282 = vpop.f32.mrf.mxu0
    %v1283 = vpop.f32.mrf.mxu0
    %1284 = vdwg.mxu0
    %1285 = vrot.lane.b32.xlu0 %v260, 112
    %v1286 = vpop.permute.xlu0 %1285
    %1287 = vrot.lane.b32.xlu0 %v260, 80
    %v1288 = vpop.permute.xlu0 %1287
    %v1290 = vsel %vm263, %v1286, 0
    %v1293 = vsel %vm263, %v1288, 0
    %1295 = vmatprep.subr.bf16.mxu0 0
    %1296 = vmatpush1.bf16.xpose.msra.mxu0 0
    %1297 = vmatprep.subr.bf16.mxu0 0
    %1298 = vmatpush1.bf16.xpose.msra.mxu0 0
    %1299 = vmatprep.subr.bf16.mxu0 0
    %1300 = vmatpush1.bf16.xpose.msra.mxu0 0
    %1301 = vmatprep.subr.bf16.mxu0 0
    %1302 = vmatpush1.bf16.xpose.msra.mxu0 0
    %1303 = vmatprep.subr.bf16.mxu0 0
    %1304 = vmatpush1.bf16.xpose.msra.mxu0 0
    %1305 = vmatprep.subr.bf16.mxu0 0
    %1306 = vmatpush1.bf16.xpose.msra.mxu0 0
    %1307 = vmatprep.subr.bf16.mxu0 0
    %1308 = vmatpush1.bf16.xpose.msra.mxu0 0
    %1309 = vmatprep.subr.bf16.mxu0 0
    %1310 = vmatpush1.bf16.xpose.msra.mxu0 %v1293
    %1311 = vmatprep.subr.bf16.mxu0 0
    %1312 = vmatpush2.bf16.xpose.msra.mxu0 0
    %1313 = vmatprep.subr.bf16.mxu0 0
    %1314 = vmatpush2.bf16.xpose.msra.mxu0 0
    %1315 = vmatprep.subr.bf16.mxu0 0
    %1316 = vmatpush2.bf16.xpose.msra.mxu0 0
    %1317 = vmatprep.subr.bf16.mxu0 0
    %1318 = vmatpush2.bf16.xpose.msra.mxu0 0
    %1319 = vmatprep.subr.bf16.mxu0 0
    %1320 = vmatpush2.bf16.xpose.msra.mxu0 0
    %1321 = vmatprep.subr.bf16.mxu0 0
    %1322 = vmatpush2.bf16.xpose.msra.mxu0 0
    %1323 = vmatprep.subr.bf16.mxu0 0
    %1324 = vmatpush2.bf16.xpose.msra.mxu0 0
    %1325 = vmatprep.subr.bf16.mxu0 0
    %1326 = vmatpush2.bf16.xpose.msra.mxu0 0
    %1327 = vmatprep.mubr.bf16.mxu0 0
    %1328 = vmatmul.mubr.bf16.gmra.mxu0 %v1290
    %v1329 = vpop.f32.mrf.mxu0
    %v1330 = vadd.f32 0.0, %v1329
    %v1331 = vpop.f32.mrf.mxu0
    %v1332 = vpop.f32.mrf.mxu0
    %v1333 = vpop.f32.mrf.mxu0
    %1334 = vdwg.mxu0
    %v1335 = vsel %vm263, %v1180, -inf
    %1336 = vmax.xlane.f32.xlu0 %v1335
    %v1337 = vpop.xlane.xlu0 %1336
    %v1338 = vsel %vm263, %v1230, -inf
    %1339 = vmax.xlane.f32.xlu0 %v1338
    %v1340 = vpop.xlane.xlu0 %1339
    %v1341 = vsel %vm263, %v1280, -inf
    %1342 = vmax.xlane.f32.xlu0 %v1341
    %v1343 = vpop.xlane.xlu0 %1342
    %v1344 = vsel %vm263, %v1330, -inf
    %1345 = vmax.xlane.f32.xlu0 %v1344
    %v1346 = vpop.xlane.xlu0 %1345
    %v1347 = vsub.f32 %v1180, %v1337
    %v1348 = vsub.f32 %v1230, %v1340
    %v1349 = vsub.f32 %v1280, %v1343
    %v1350 = vsub.f32 %v1330, %v1346
    %v1351 = vmul.f32 %v1347, 1.442695
    %v1352 = vpow.pop %v1351
    %v1353 = vmul.f32 %v1348, 1.442695
    %v1354 = vpow.pop %v1353
    %v1355 = vmul.f32 %v1349, 1.442695
    %v1356 = vpow.pop %v1355
    %v1357 = vmul.f32 %v1350, 1.442695
    %v1358 = vpow.pop %v1357
    %v1359 = vsel %vm263, %v1352, 0.0
    %1360 = vadd.xlane.f32.xlu0 %v1359
    %v1361 = vpop.xlane.xlu0 %1360
    %v1362 = vsel %vm263, %v1354, 0.0
    %1363 = vadd.xlane.f32.xlu0 %v1362
    %v1364 = vpop.xlane.xlu0 %1363
    %v1365 = vsel %vm263, %v1356, 0.0
    %1366 = vadd.xlane.f32.xlu0 %v1365
    %v1367 = vpop.xlane.xlu0 %1366
    %v1368 = vsel %vm263, %v1358, 0.0
    %1369 = vadd.xlane.f32.xlu0 %v1368
    %v1370 = vpop.xlane.xlu0 %1369
    %v1371 = vrcp.pop %v1361
    %v1372 = vrcp.pop %v1364
    %v1373 = vrcp.pop %v1367
    %v1374 = vrcp.pop %v1370
    %v1375 = vmul.f32 %v1352, %v1371
    %v1376 = vmul.f32 %v1354, %v1372
    %v1377 = vmul.f32 %v1356, %v1373
    %v1378 = vmul.f32 %v1358, %v1374
    %v1379 = vpack.c.bf16 %v1375, %v1375
    %v1380 = vpack.c.bf16 %v1376, %v1376
    %v1381 = vpack.c.bf16 %v1377, %v1377
    %v1382 = vpack.c.bf16 %v1378, %v1378
    %1383 = vrot.lane.b32.xlu0 %v257, 48
    %v1384 = vpop.permute.xlu0 %1383
    %v1386 = vsel %vm263, %v1379, 0
    %v1389 = vsel %vm507, %v1384, 0
    %1391 = vmatprep.subr.bf16.mxu0 0
    %1392 = vmatpush1.bf16.msra.mxu0 0
    %1393 = vmatprep.subr.bf16.mxu0 0
    %1394 = vmatpush1.bf16.msra.mxu0 0
    %1395 = vmatprep.subr.bf16.mxu0 0
    %1396 = vmatpush1.bf16.msra.mxu0 0
    %1397 = vmatprep.subr.bf16.mxu0 0
    %1398 = vmatpush1.bf16.msra.mxu0 0
    %1399 = vmatprep.subr.bf16.mxu0 0
    %1400 = vmatpush1.bf16.msra.mxu0 0
    %1401 = vmatprep.subr.bf16.mxu0 0
    %1402 = vmatpush1.bf16.msra.mxu0 0
    %1403 = vmatprep.subr.bf16.mxu0 0
    %1404 = vmatpush1.bf16.msra.mxu0 0
    %1405 = vmatprep.subr.bf16.mxu0 0
    %1406 = vmatpush1.bf16.msra.mxu0 %v1389
    %1407 = vmatprep.subr.bf16.mxu0 0
    %1408 = vmatpush2.bf16.msra.mxu0 0
    %1409 = vmatprep.subr.bf16.mxu0 0
    %1410 = vmatpush2.bf16.msra.mxu0 0
    %1411 = vmatprep.subr.bf16.mxu0 0
    %1412 = vmatpush2.bf16.msra.mxu0 0
    %1413 = vmatprep.subr.bf16.mxu0 0
    %1414 = vmatpush2.bf16.msra.mxu0 0
    %1415 = vmatprep.subr.bf16.mxu0 0
    %1416 = vmatpush2.bf16.msra.mxu0 0
    %1417 = vmatprep.subr.bf16.mxu0 0
    %1418 = vmatpush2.bf16.msra.mxu0 0
    %1419 = vmatprep.subr.bf16.mxu0 0
    %1420 = vmatpush2.bf16.msra.mxu0 0
    %1421 = vmatprep.subr.bf16.mxu0 0
    %1422 = vmatpush2.bf16.msra.mxu0 0
    %1423 = vmatprep.mubr.bf16.mxu0 0
    %1424 = vmatmul.mubr.bf16.gmra.mxu0 %v1386
    %v1425 = vpop.f32.mrf.mxu0
    %v1426 = vadd.f32 0.0, %v1425
    %v1427 = vpop.f32.mrf.mxu0
    %v1428 = vpop.f32.mrf.mxu0
    %v1429 = vpop.f32.mrf.mxu0
    %1430 = vdwg.mxu0
    %1431 = vrot.lane.b32.xlu0 %v258, 48
    %v1432 = vpop.permute.xlu0 %1431
    %v1434 = vsel %vm263, %v1380, 0
    %v1437 = vsel %vm507, %v1432, 0
    %1439 = vmatprep.subr.bf16.mxu0 0
    %1440 = vmatpush1.bf16.msra.mxu0 0
    %1441 = vmatprep.subr.bf16.mxu0 0
    %1442 = vmatpush1.bf16.msra.mxu0 0
    %1443 = vmatprep.subr.bf16.mxu0 0
    %1444 = vmatpush1.bf16.msra.mxu0 0
    %1445 = vmatprep.subr.bf16.mxu0 0
    %1446 = vmatpush1.bf16.msra.mxu0 0
    %1447 = vmatprep.subr.bf16.mxu0 0
    %1448 = vmatpush1.bf16.msra.mxu0 0
    %1449 = vmatprep.subr.bf16.mxu0 0
    %1450 = vmatpush1.bf16.msra.mxu0 0
    %1451 = vmatprep.subr.bf16.mxu0 0
    %1452 = vmatpush1.bf16.msra.mxu0 0
    %1453 = vmatprep.subr.bf16.mxu0 0
    %1454 = vmatpush1.bf16.msra.mxu0 %v1437
    %1455 = vmatprep.subr.bf16.mxu0 0
    %1456 = vmatpush2.bf16.msra.mxu0 0
    %1457 = vmatprep.subr.bf16.mxu0 0
    %1458 = vmatpush2.bf16.msra.mxu0 0
    %1459 = vmatprep.subr.bf16.mxu0 0
    %1460 = vmatpush2.bf16.msra.mxu0 0
    %1461 = vmatprep.subr.bf16.mxu0 0
    %1462 = vmatpush2.bf16.msra.mxu0 0
    %1463 = vmatprep.subr.bf16.mxu0 0
    %1464 = vmatpush2.bf16.msra.mxu0 0
    %1465 = vmatprep.subr.bf16.mxu0 0
    %1466 = vmatpush2.bf16.msra.mxu0 0
    %1467 = vmatprep.subr.bf16.mxu0 0
    %1468 = vmatpush2.bf16.msra.mxu0 0
    %1469 = vmatprep.subr.bf16.mxu0 0
    %1470 = vmatpush2.bf16.msra.mxu0 0
    %1471 = vmatprep.mubr.bf16.mxu0 0
    %1472 = vmatmul.mubr.bf16.gmra.mxu0 %v1434
    %v1473 = vpop.f32.mrf.mxu0
    %v1474 = vadd.f32 0.0, %v1473
    %v1475 = vpop.f32.mrf.mxu0
    %v1476 = vpop.f32.mrf.mxu0
    %v1477 = vpop.f32.mrf.mxu0
    %1478 = vdwg.mxu0
    %1479 = vrot.lane.b32.xlu0 %v259, 48
    %v1480 = vpop.permute.xlu0 %1479
    %v1482 = vsel %vm263, %v1381, 0
    %v1485 = vsel %vm507, %v1480, 0
    %1487 = vmatprep.subr.bf16.mxu0 0
    %1488 = vmatpush1.bf16.msra.mxu0 0
    %1489 = vmatprep.subr.bf16.mxu0 0
    %1490 = vmatpush1.bf16.msra.mxu0 0
    %1491 = vmatprep.subr.bf16.mxu0 0
    %1492 = vmatpush1.bf16.msra.mxu0 0
    %1493 = vmatprep.subr.bf16.mxu0 0
    %1494 = vmatpush1.bf16.msra.mxu0 0
    %1495 = vmatprep.subr.bf16.mxu0 0
    %1496 = vmatpush1.bf16.msra.mxu0 0
    %1497 = vmatprep.subr.bf16.mxu0 0
    %1498 = vmatpush1.bf16.msra.mxu0 0
    %1499 = vmatprep.subr.bf16.mxu0 0
    %1500 = vmatpush1.bf16.msra.mxu0 0
    %1501 = vmatprep.subr.bf16.mxu0 0
    %1502 = vmatpush1.bf16.msra.mxu0 %v1485
    %1503 = vmatprep.subr.bf16.mxu0 0
    %1504 = vmatpush2.bf16.msra.mxu0 0
    %1505 = vmatprep.subr.bf16.mxu0 0
    %1506 = vmatpush2.bf16.msra.mxu0 0
    %1507 = vmatprep.subr.bf16.mxu0 0
    %1508 = vmatpush2.bf16.msra.mxu0 0
    %1509 = vmatprep.subr.bf16.mxu0 0
    %1510 = vmatpush2.bf16.msra.mxu0 0
    %1511 = vmatprep.subr.bf16.mxu0 0
    %1512 = vmatpush2.bf16.msra.mxu0 0
    %1513 = vmatprep.subr.bf16.mxu0 0
    %1514 = vmatpush2.bf16.msra.mxu0 0
    %1515 = vmatprep.subr.bf16.mxu0 0
    %1516 = vmatpush2.bf16.msra.mxu0 0
    %1517 = vmatprep.subr.bf16.mxu0 0
    %1518 = vmatpush2.bf16.msra.mxu0 0
    %1519 = vmatprep.mubr.bf16.mxu0 0
    %1520 = vmatmul.mubr.bf16.gmra.mxu0 %v1482
    %v1521 = vpop.f32.mrf.mxu0
    %v1522 = vadd.f32 0.0, %v1521
    %v1523 = vpop.f32.mrf.mxu0
    %v1524 = vpop.f32.mrf.mxu0
    %v1525 = vpop.f32.mrf.mxu0
    %1526 = vdwg.mxu0
    %1527 = vrot.lane.b32.xlu0 %v260, 48
    %v1528 = vpop.permute.xlu0 %1527
    %v1530 = vsel %vm263, %v1382, 0
    %v1533 = vsel %vm507, %v1528, 0
    %1535 = vmatprep.subr.bf16.mxu0 0
    %1536 = vmatpush1.bf16.msra.mxu0 0
    %1537 = vmatprep.subr.bf16.mxu0 0
    %1538 = vmatpush1.bf16.msra.mxu0 0
    %1539 = vmatprep.subr.bf16.mxu0 0
    %1540 = vmatpush1.bf16.msra.mxu0 0
    %1541 = vmatprep.subr.bf16.mxu0 0
    %1542 = vmatpush1.bf16.msra.mxu0 0
    %1543 = vmatprep.subr.bf16.mxu0 0
    %1544 = vmatpush1.bf16.msra.mxu0 0
    %1545 = vmatprep.subr.bf16.mxu0 0
    %1546 = vmatpush1.bf16.msra.mxu0 0
    %1547 = vmatprep.subr.bf16.mxu0 0
    %1548 = vmatpush1.bf16.msra.mxu0 0
    %1549 = vmatprep.subr.bf16.mxu0 0
    %1550 = vmatpush1.bf16.msra.mxu0 %v1533
    %1551 = vmatprep.subr.bf16.mxu0 0
    %1552 = vmatpush2.bf16.msra.mxu0 0
    %1553 = vmatprep.subr.bf16.mxu0 0
    %1554 = vmatpush2.bf16.msra.mxu0 0
    %1555 = vmatprep.subr.bf16.mxu0 0
    %1556 = vmatpush2.bf16.msra.mxu0 0
    %1557 = vmatprep.subr.bf16.mxu0 0
    %1558 = vmatpush2.bf16.msra.mxu0 0
    %1559 = vmatprep.subr.bf16.mxu0 0
    %1560 = vmatpush2.bf16.msra.mxu0 0
    %1561 = vmatprep.subr.bf16.mxu0 0
    %1562 = vmatpush2.bf16.msra.mxu0 0
    %1563 = vmatprep.subr.bf16.mxu0 0
    %1564 = vmatpush2.bf16.msra.mxu0 0
    %1565 = vmatprep.subr.bf16.mxu0 0
    %1566 = vmatpush2.bf16.msra.mxu0 0
    %1567 = vmatprep.mubr.bf16.mxu0 0
    %1568 = vmatmul.mubr.bf16.gmra.mxu0 %v1530
    %v1569 = vpop.f32.mrf.mxu0
    %v1570 = vadd.f32 0.0, %v1569
    %v1571 = vpop.f32.mrf.mxu0
    %v1572 = vpop.f32.mrf.mxu0
    %v1573 = vpop.f32.mrf.mxu0
    %1574 = vdwg.mxu0
    %1575 = vrot.lane.b32.xlu0 %v257, 104
    %v1576 = vpop.permute.xlu0 %1575
    %1577 = vrot.lane.b32.xlu0 %v257, 72
    %v1578 = vpop.permute.xlu0 %1577
    %v1580 = vsel %vm263, %v1576, 0
    %v1583 = vsel %vm263, %v1578, 0
    %1585 = vmatprep.subr.bf16.mxu0 0
    %1586 = vmatpush1.bf16.xpose.msra.mxu0 0
    %1587 = vmatprep.subr.bf16.mxu0 0
    %1588 = vmatpush1.bf16.xpose.msra.mxu0 0
    %1589 = vmatprep.subr.bf16.mxu0 0
    %1590 = vmatpush1.bf16.xpose.msra.mxu0 0
    %1591 = vmatprep.subr.bf16.mxu0 0
    %1592 = vmatpush1.bf16.xpose.msra.mxu0 0
    %1593 = vmatprep.subr.bf16.mxu0 0
    %1594 = vmatpush1.bf16.xpose.msra.mxu0 0
    %1595 = vmatprep.subr.bf16.mxu0 0
    %1596 = vmatpush1.bf16.xpose.msra.mxu0 0
    %1597 = vmatprep.subr.bf16.mxu0 0
    %1598 = vmatpush1.bf16.xpose.msra.mxu0 0
    %1599 = vmatprep.subr.bf16.mxu0 0
    %1600 = vmatpush1.bf16.xpose.msra.mxu0 %v1583
    %1601 = vmatprep.subr.bf16.mxu0 0
    %1602 = vmatpush2.bf16.xpose.msra.mxu0 0
    %1603 = vmatprep.subr.bf16.mxu0 0
    %1604 = vmatpush2.bf16.xpose.msra.mxu0 0
    %1605 = vmatprep.subr.bf16.mxu0 0
    %1606 = vmatpush2.bf16.xpose.msra.mxu0 0
    %1607 = vmatprep.subr.bf16.mxu0 0
    %1608 = vmatpush2.bf16.xpose.msra.mxu0 0
    %1609 = vmatprep.subr.bf16.mxu0 0
    %1610 = vmatpush2.bf16.xpose.msra.mxu0 0
    %1611 = vmatprep.subr.bf16.mxu0 0
    %1612 = vmatpush2.bf16.xpose.msra.mxu0 0
    %1613 = vmatprep.subr.bf16.mxu0 0
    %1614 = vmatpush2.bf16.xpose.msra.mxu0 0
    %1615 = vmatprep.subr.bf16.mxu0 0
    %1616 = vmatpush2.bf16.xpose.msra.mxu0 0
    %1617 = vmatprep.mubr.bf16.mxu0 0
    %1618 = vmatmul.mubr.bf16.gmra.mxu0 %v1580
    %v1619 = vpop.f32.mrf.mxu0
    %v1620 = vadd.f32 0.0, %v1619
    %v1621 = vpop.f32.mrf.mxu0
    %v1622 = vpop.f32.mrf.mxu0
    %v1623 = vpop.f32.mrf.mxu0
    %1624 = vdwg.mxu0
    %1625 = vrot.lane.b32.xlu0 %v258, 104
    %v1626 = vpop.permute.xlu0 %1625
    %1627 = vrot.lane.b32.xlu0 %v258, 72
    %v1628 = vpop.permute.xlu0 %1627
    %v1630 = vsel %vm263, %v1626, 0
    %v1633 = vsel %vm263, %v1628, 0
    %1635 = vmatprep.subr.bf16.mxu0 0
    %1636 = vmatpush1.bf16.xpose.msra.mxu0 0
    %1637 = vmatprep.subr.bf16.mxu0 0
    %1638 = vmatpush1.bf16.xpose.msra.mxu0 0
    %1639 = vmatprep.subr.bf16.mxu0 0
    %1640 = vmatpush1.bf16.xpose.msra.mxu0 0
    %1641 = vmatprep.subr.bf16.mxu0 0
    %1642 = vmatpush1.bf16.xpose.msra.mxu0 0
    %1643 = vmatprep.subr.bf16.mxu0 0
    %1644 = vmatpush1.bf16.xpose.msra.mxu0 0
    %1645 = vmatprep.subr.bf16.mxu0 0
    %1646 = vmatpush1.bf16.xpose.msra.mxu0 0
    %1647 = vmatprep.subr.bf16.mxu0 0
    %1648 = vmatpush1.bf16.xpose.msra.mxu0 0
    %1649 = vmatprep.subr.bf16.mxu0 0
    %1650 = vmatpush1.bf16.xpose.msra.mxu0 %v1633
    %1651 = vmatprep.subr.bf16.mxu0 0
    %1652 = vmatpush2.bf16.xpose.msra.mxu0 0
    %1653 = vmatprep.subr.bf16.mxu0 0
    %1654 = vmatpush2.bf16.xpose.msra.mxu0 0
    %1655 = vmatprep.subr.bf16.mxu0 0
    %1656 = vmatpush2.bf16.xpose.msra.mxu0 0
    %1657 = vmatprep.subr.bf16.mxu0 0
    %1658 = vmatpush2.bf16.xpose.msra.mxu0 0
    %1659 = vmatprep.subr.bf16.mxu0 0
    %1660 = vmatpush2.bf16.xpose.msra.mxu0 0
    %1661 = vmatprep.subr.bf16.mxu0 0
    %1662 = vmatpush2.bf16.xpose.msra.mxu0 0
    %1663 = vmatprep.subr.bf16.mxu0 0
    %1664 = vmatpush2.bf16.xpose.msra.mxu0 0
    %1665 = vmatprep.subr.bf16.mxu0 0
    %1666 = vmatpush2.bf16.xpose.msra.mxu0 0
    %1667 = vmatprep.mubr.bf16.mxu0 0
    %1668 = vmatmul.mubr.bf16.gmra.mxu0 %v1630
    %v1669 = vpop.f32.mrf.mxu0
    %v1670 = vadd.f32 0.0, %v1669
    %v1671 = vpop.f32.mrf.mxu0
    %v1672 = vpop.f32.mrf.mxu0
    %v1673 = vpop.f32.mrf.mxu0
    %1674 = vdwg.mxu0
    %1675 = vrot.lane.b32.xlu0 %v259, 104
    %v1676 = vpop.permute.xlu0 %1675
    %1677 = vrot.lane.b32.xlu0 %v259, 72
    %v1678 = vpop.permute.xlu0 %1677
    %v1680 = vsel %vm263, %v1676, 0
    %v1683 = vsel %vm263, %v1678, 0
    %1685 = vmatprep.subr.bf16.mxu0 0
    %1686 = vmatpush1.bf16.xpose.msra.mxu0 0
    %1687 = vmatprep.subr.bf16.mxu0 0
    %1688 = vmatpush1.bf16.xpose.msra.mxu0 0
    %1689 = vmatprep.subr.bf16.mxu0 0
    %1690 = vmatpush1.bf16.xpose.msra.mxu0 0
    %1691 = vmatprep.subr.bf16.mxu0 0
    %1692 = vmatpush1.bf16.xpose.msra.mxu0 0
    %1693 = vmatprep.subr.bf16.mxu0 0
    %1694 = vmatpush1.bf16.xpose.msra.mxu0 0
    %1695 = vmatprep.subr.bf16.mxu0 0
    %1696 = vmatpush1.bf16.xpose.msra.mxu0 0
    %1697 = vmatprep.subr.bf16.mxu0 0
    %1698 = vmatpush1.bf16.xpose.msra.mxu0 0
    %1699 = vmatprep.subr.bf16.mxu0 0
    %1700 = vmatpush1.bf16.xpose.msra.mxu0 %v1683
    %1701 = vmatprep.subr.bf16.mxu0 0
    %1702 = vmatpush2.bf16.xpose.msra.mxu0 0
    %1703 = vmatprep.subr.bf16.mxu0 0
    %1704 = vmatpush2.bf16.xpose.msra.mxu0 0
    %1705 = vmatprep.subr.bf16.mxu0 0
    %1706 = vmatpush2.bf16.xpose.msra.mxu0 0
    %1707 = vmatprep.subr.bf16.mxu0 0
    %1708 = vmatpush2.bf16.xpose.msra.mxu0 0
    %1709 = vmatprep.subr.bf16.mxu0 0
    %1710 = vmatpush2.bf16.xpose.msra.mxu0 0
    %1711 = vmatprep.subr.bf16.mxu0 0
    %1712 = vmatpush2.bf16.xpose.msra.mxu0 0
    %1713 = vmatprep.subr.bf16.mxu0 0
    %1714 = vmatpush2.bf16.xpose.msra.mxu0 0
    %1715 = vmatprep.subr.bf16.mxu0 0
    %1716 = vmatpush2.bf16.xpose.msra.mxu0 0
    %1717 = vmatprep.mubr.bf16.mxu0 0
    %1718 = vmatmul.mubr.bf16.gmra.mxu0 %v1680
    %v1719 = vpop.f32.mrf.mxu0
    %v1720 = vadd.f32 0.0, %v1719
    %v1721 = vpop.f32.mrf.mxu0
    %v1722 = vpop.f32.mrf.mxu0
    %v1723 = vpop.f32.mrf.mxu0
    %1724 = vdwg.mxu0
    %1725 = vrot.lane.b32.xlu0 %v260, 104
    %v1726 = vpop.permute.xlu0 %1725
    %1727 = vrot.lane.b32.xlu0 %v260, 72
    %v1728 = vpop.permute.xlu0 %1727
    %v1730 = vsel %vm263, %v1726, 0
    %v1733 = vsel %vm263, %v1728, 0
    %1735 = vmatprep.subr.bf16.mxu0 0
    %1736 = vmatpush1.bf16.xpose.msra.mxu0 0
    %1737 = vmatprep.subr.bf16.mxu0 0
    %1738 = vmatpush1.bf16.xpose.msra.mxu0 0
    %1739 = vmatprep.subr.bf16.mxu0 0
    %1740 = vmatpush1.bf16.xpose.msra.mxu0 0
    %1741 = vmatprep.subr.bf16.mxu0 0
    %1742 = vmatpush1.bf16.xpose.msra.mxu0 0
    %1743 = vmatprep.subr.bf16.mxu0 0
    %1744 = vmatpush1.bf16.xpose.msra.mxu0 0
    %1745 = vmatprep.subr.bf16.mxu0 0
    %1746 = vmatpush1.bf16.xpose.msra.mxu0 0
    %1747 = vmatprep.subr.bf16.mxu0 0
    %1748 = vmatpush1.bf16.xpose.msra.mxu0 0
    %1749 = vmatprep.subr.bf16.mxu0 0
    %1750 = vmatpush1.bf16.xpose.msra.mxu0 %v1733
    %1751 = vmatprep.subr.bf16.mxu0 0
    %1752 = vmatpush2.bf16.xpose.msra.mxu0 0
    %1753 = vmatprep.subr.bf16.mxu0 0
    %1754 = vmatpush2.bf16.xpose.msra.mxu0 0
    %1755 = vmatprep.subr.bf16.mxu0 0
    %1756 = vmatpush2.bf16.xpose.msra.mxu0 0
    %1757 = vmatprep.subr.bf16.mxu0 0
    %1758 = vmatpush2.bf16.xpose.msra.mxu0 0
    %1759 = vmatprep.subr.bf16.mxu0 0
    %1760 = vmatpush2.bf16.xpose.msra.mxu0 0
    %1761 = vmatprep.subr.bf16.mxu0 0
    %1762 = vmatpush2.bf16.xpose.msra.mxu0 0
    %1763 = vmatprep.subr.bf16.mxu0 0
    %1764 = vmatpush2.bf16.xpose.msra.mxu0 0
    %1765 = vmatprep.subr.bf16.mxu0 0
    %1766 = vmatpush2.bf16.xpose.msra.mxu0 0
    %1767 = vmatprep.mubr.bf16.mxu0 0
    %1768 = vmatmul.mubr.bf16.gmra.mxu0 %v1730
    %v1769 = vpop.f32.mrf.mxu0
    %v1770 = vadd.f32 0.0, %v1769
    %v1771 = vpop.f32.mrf.mxu0
    %v1772 = vpop.f32.mrf.mxu0
    %v1773 = vpop.f32.mrf.mxu0
    %1774 = vdwg.mxu0
    %v1775 = vsel %vm263, %v1620, -inf
    %1776 = vmax.xlane.f32.xlu0 %v1775
    %v1777 = vpop.xlane.xlu0 %1776
    %v1778 = vsel %vm263, %v1670, -inf
    %1779 = vmax.xlane.f32.xlu0 %v1778
    %v1780 = vpop.xlane.xlu0 %1779
    %v1781 = vsel %vm263, %v1720, -inf
    %1782 = vmax.xlane.f32.xlu0 %v1781
    %v1783 = vpop.xlane.xlu0 %1782
    %v1784 = vsel %vm263, %v1770, -inf
    %1785 = vmax.xlane.f32.xlu0 %v1784
    %v1786 = vpop.xlane.xlu0 %1785
    %v1787 = vsub.f32 %v1620, %v1777
    %v1788 = vsub.f32 %v1670, %v1780
    %v1789 = vsub.f32 %v1720, %v1783
    %v1790 = vsub.f32 %v1770, %v1786
    %v1791 = vmul.f32 %v1787, 1.442695
    %v1792 = vpow.pop %v1791
    %v1793 = vmul.f32 %v1788, 1.442695
    %v1794 = vpow.pop %v1793
    %v1795 = vmul.f32 %v1789, 1.442695
    %v1796 = vpow.pop %v1795
    %v1797 = vmul.f32 %v1790, 1.442695
    %v1798 = vpow.pop %v1797
    %v1799 = vsel %vm263, %v1792, 0.0
    %1800 = vadd.xlane.f32.xlu0 %v1799
    %v1801 = vpop.xlane.xlu0 %1800
    %v1802 = vsel %vm263, %v1794, 0.0
    %1803 = vadd.xlane.f32.xlu0 %v1802
    %v1804 = vpop.xlane.xlu0 %1803
    %v1805 = vsel %vm263, %v1796, 0.0
    %1806 = vadd.xlane.f32.xlu0 %v1805
    %v1807 = vpop.xlane.xlu0 %1806
    %v1808 = vsel %vm263, %v1798, 0.0
    %1809 = vadd.xlane.f32.xlu0 %v1808
    %v1810 = vpop.xlane.xlu0 %1809
    %v1811 = vrcp.pop %v1801
    %v1812 = vrcp.pop %v1804
    %v1813 = vrcp.pop %v1807
    %v1814 = vrcp.pop %v1810
    %v1815 = vmul.f32 %v1792, %v1811
    %v1816 = vmul.f32 %v1794, %v1812
    %v1817 = vmul.f32 %v1796, %v1813
    %v1818 = vmul.f32 %v1798, %v1814
    %v1819 = vpack.c.bf16 %v1815, %v1815
    %v1820 = vpack.c.bf16 %v1816, %v1816
    %v1821 = vpack.c.bf16 %v1817, %v1817
    %v1822 = vpack.c.bf16 %v1818, %v1818
    %1823 = vrot.lane.b32.xlu0 %v257, 40
    %v1824 = vpop.permute.xlu0 %1823
    %v1826 = vsel %vm263, %v1819, 0
    %v1829 = vsel %vm507, %v1824, 0
    %1831 = vmatprep.subr.bf16.mxu0 0
    %1832 = vmatpush1.bf16.msra.mxu0 0
    %1833 = vmatprep.subr.bf16.mxu0 0
    %1834 = vmatpush1.bf16.msra.mxu0 0
    %1835 = vmatprep.subr.bf16.mxu0 0
    %1836 = vmatpush1.bf16.msra.mxu0 0
    %1837 = vmatprep.subr.bf16.mxu0 0
    %1838 = vmatpush1.bf16.msra.mxu0 0
    %1839 = vmatprep.subr.bf16.mxu0 0
    %1840 = vmatpush1.bf16.msra.mxu0 0
    %1841 = vmatprep.subr.bf16.mxu0 0
    %1842 = vmatpush1.bf16.msra.mxu0 0
    %1843 = vmatprep.subr.bf16.mxu0 0
    %1844 = vmatpush1.bf16.msra.mxu0 0
    %1845 = vmatprep.subr.bf16.mxu0 0
    %1846 = vmatpush1.bf16.msra.mxu0 %v1829
    %1847 = vmatprep.subr.bf16.mxu0 0
    %1848 = vmatpush2.bf16.msra.mxu0 0
    %1849 = vmatprep.subr.bf16.mxu0 0
    %1850 = vmatpush2.bf16.msra.mxu0 0
    %1851 = vmatprep.subr.bf16.mxu0 0
    %1852 = vmatpush2.bf16.msra.mxu0 0
    %1853 = vmatprep.subr.bf16.mxu0 0
    %1854 = vmatpush2.bf16.msra.mxu0 0
    %1855 = vmatprep.subr.bf16.mxu0 0
    %1856 = vmatpush2.bf16.msra.mxu0 0
    %1857 = vmatprep.subr.bf16.mxu0 0
    %1858 = vmatpush2.bf16.msra.mxu0 0
    %1859 = vmatprep.subr.bf16.mxu0 0
    %1860 = vmatpush2.bf16.msra.mxu0 0
    %1861 = vmatprep.subr.bf16.mxu0 0
    %1862 = vmatpush2.bf16.msra.mxu0 0
    %1863 = vmatprep.mubr.bf16.mxu0 0
    %1864 = vmatmul.mubr.bf16.gmra.mxu0 %v1826
    %v1865 = vpop.f32.mrf.mxu0
    %v1866 = vadd.f32 0.0, %v1865
    %v1867 = vpop.f32.mrf.mxu0
    %v1868 = vpop.f32.mrf.mxu0
    %v1869 = vpop.f32.mrf.mxu0
    %1870 = vdwg.mxu0
    %1871 = vrot.lane.b32.xlu0 %v258, 40
    %v1872 = vpop.permute.xlu0 %1871
    %v1874 = vsel %vm263, %v1820, 0
    %v1877 = vsel %vm507, %v1872, 0
    %1879 = vmatprep.subr.bf16.mxu0 0
    %1880 = vmatpush1.bf16.msra.mxu0 0
    %1881 = vmatprep.subr.bf16.mxu0 0
    %1882 = vmatpush1.bf16.msra.mxu0 0
    %1883 = vmatprep.subr.bf16.mxu0 0
    %1884 = vmatpush1.bf16.msra.mxu0 0
    %1885 = vmatprep.subr.bf16.mxu0 0
    %1886 = vmatpush1.bf16.msra.mxu0 0
    %1887 = vmatprep.subr.bf16.mxu0 0
    %1888 = vmatpush1.bf16.msra.mxu0 0
    %1889 = vmatprep.subr.bf16.mxu0 0
    %1890 = vmatpush1.bf16.msra.mxu0 0
    %1891 = vmatprep.subr.bf16.mxu0 0
    %1892 = vmatpush1.bf16.msra.mxu0 0
    %1893 = vmatprep.subr.bf16.mxu0 0
    %1894 = vmatpush1.bf16.msra.mxu0 %v1877
    %1895 = vmatprep.subr.bf16.mxu0 0
    %1896 = vmatpush2.bf16.msra.mxu0 0
    %1897 = vmatprep.subr.bf16.mxu0 0
    %1898 = vmatpush2.bf16.msra.mxu0 0
    %1899 = vmatprep.subr.bf16.mxu0 0
    %1900 = vmatpush2.bf16.msra.mxu0 0
    %1901 = vmatprep.subr.bf16.mxu0 0
    %1902 = vmatpush2.bf16.msra.mxu0 0
    %1903 = vmatprep.subr.bf16.mxu0 0
    %1904 = vmatpush2.bf16.msra.mxu0 0
    %1905 = vmatprep.subr.bf16.mxu0 0
    %1906 = vmatpush2.bf16.msra.mxu0 0
    %1907 = vmatprep.subr.bf16.mxu0 0
    %1908 = vmatpush2.bf16.msra.mxu0 0
    %1909 = vmatprep.subr.bf16.mxu0 0
    %1910 = vmatpush2.bf16.msra.mxu0 0
    %1911 = vmatprep.mubr.bf16.mxu0 0
    %1912 = vmatmul.mubr.bf16.gmra.mxu0 %v1874
    %v1913 = vpop.f32.mrf.mxu0
    %v1914 = vadd.f32 0.0, %v1913
    %v1915 = vpop.f32.mrf.mxu0
    %v1916 = vpop.f32.mrf.mxu0
    %v1917 = vpop.f32.mrf.mxu0
    %1918 = vdwg.mxu0
    %1919 = vrot.lane.b32.xlu0 %v259, 40
    %v1920 = vpop.permute.xlu0 %1919
    %v1922 = vsel %vm263, %v1821, 0
    %v1925 = vsel %vm507, %v1920, 0
    %1927 = vmatprep.subr.bf16.mxu0 0
    %1928 = vmatpush1.bf16.msra.mxu0 0
    %1929 = vmatprep.subr.bf16.mxu0 0
    %1930 = vmatpush1.bf16.msra.mxu0 0
    %1931 = vmatprep.subr.bf16.mxu0 0
    %1932 = vmatpush1.bf16.msra.mxu0 0
    %1933 = vmatprep.subr.bf16.mxu0 0
    %1934 = vmatpush1.bf16.msra.mxu0 0
    %1935 = vmatprep.subr.bf16.mxu0 0
    %1936 = vmatpush1.bf16.msra.mxu0 0
    %1937 = vmatprep.subr.bf16.mxu0 0
    %1938 = vmatpush1.bf16.msra.mxu0 0
    %1939 = vmatprep.subr.bf16.mxu0 0
    %1940 = vmatpush1.bf16.msra.mxu0 0
    %1941 = vmatprep.subr.bf16.mxu0 0
    %1942 = vmatpush1.bf16.msra.mxu0 %v1925
    %1943 = vmatprep.subr.bf16.mxu0 0
    %1944 = vmatpush2.bf16.msra.mxu0 0
    %1945 = vmatprep.subr.bf16.mxu0 0
    %1946 = vmatpush2.bf16.msra.mxu0 0
    %1947 = vmatprep.subr.bf16.mxu0 0
    %1948 = vmatpush2.bf16.msra.mxu0 0
    %1949 = vmatprep.subr.bf16.mxu0 0
    %1950 = vmatpush2.bf16.msra.mxu0 0
    %1951 = vmatprep.subr.bf16.mxu0 0
    %1952 = vmatpush2.bf16.msra.mxu0 0
    %1953 = vmatprep.subr.bf16.mxu0 0
    %1954 = vmatpush2.bf16.msra.mxu0 0
    %1955 = vmatprep.subr.bf16.mxu0 0
    %1956 = vmatpush2.bf16.msra.mxu0 0
    %1957 = vmatprep.subr.bf16.mxu0 0
    %1958 = vmatpush2.bf16.msra.mxu0 0
    %1959 = vmatprep.mubr.bf16.mxu0 0
    %1960 = vmatmul.mubr.bf16.gmra.mxu0 %v1922
    %v1961 = vpop.f32.mrf.mxu0
    %v1962 = vadd.f32 0.0, %v1961
    %v1963 = vpop.f32.mrf.mxu0
    %v1964 = vpop.f32.mrf.mxu0
    %v1965 = vpop.f32.mrf.mxu0
    %1966 = vdwg.mxu0
    %1967 = vrot.lane.b32.xlu0 %v260, 40
    %v1968 = vpop.permute.xlu0 %1967
    %v1970 = vsel %vm263, %v1822, 0
    %v1973 = vsel %vm507, %v1968, 0
    %1975 = vmatprep.subr.bf16.mxu0 0
    %1976 = vmatpush1.bf16.msra.mxu0 0
    %1977 = vmatprep.subr.bf16.mxu0 0
    %1978 = vmatpush1.bf16.msra.mxu0 0
    %1979 = vmatprep.subr.bf16.mxu0 0
    %1980 = vmatpush1.bf16.msra.mxu0 0
    %1981 = vmatprep.subr.bf16.mxu0 0
    %1982 = vmatpush1.bf16.msra.mxu0 0
    %1983 = vmatprep.subr.bf16.mxu0 0
    %1984 = vmatpush1.bf16.msra.mxu0 0
    %1985 = vmatprep.subr.bf16.mxu0 0
    %1986 = vmatpush1.bf16.msra.mxu0 0
    %1987 = vmatprep.subr.bf16.mxu0 0
    %1988 = vmatpush1.bf16.msra.mxu0 0
    %1989 = vmatprep.subr.bf16.mxu0 0
    %1990 = vmatpush1.bf16.msra.mxu0 %v1973
    %1991 = vmatprep.subr.bf16.mxu0 0
    %1992 = vmatpush2.bf16.msra.mxu0 0
    %1993 = vmatprep.subr.bf16.mxu0 0
    %1994 = vmatpush2.bf16.msra.mxu0 0
    %1995 = vmatprep.subr.bf16.mxu0 0
    %1996 = vmatpush2.bf16.msra.mxu0 0
    %1997 = vmatprep.subr.bf16.mxu0 0
    %1998 = vmatpush2.bf16.msra.mxu0 0
    %1999 = vmatprep.subr.bf16.mxu0 0
    %2000 = vmatpush2.bf16.msra.mxu0 0
    %2001 = vmatprep.subr.bf16.mxu0 0
    %2002 = vmatpush2.bf16.msra.mxu0 0
    %2003 = vmatprep.subr.bf16.mxu0 0
    %2004 = vmatpush2.bf16.msra.mxu0 0
    %2005 = vmatprep.subr.bf16.mxu0 0
    %2006 = vmatpush2.bf16.msra.mxu0 0
    %2007 = vmatprep.mubr.bf16.mxu0 0
    %2008 = vmatmul.mubr.bf16.gmra.mxu0 %v1970
    %v2009 = vpop.f32.mrf.mxu0
    %v2010 = vadd.f32 0.0, %v2009
    %v2011 = vpop.f32.mrf.mxu0
    %v2012 = vpop.f32.mrf.mxu0
    %v2013 = vpop.f32.mrf.mxu0
    %2014 = vdwg.mxu0
    %2019 = vrot.lane.b32.xlu0 %v986, 8
    %v2020 = vpop.permute.xlu0 %2019
    %2021 = vrot.lane.b32.xlu0 %v1034, 8
    %v2022 = vpop.permute.xlu0 %2021
    %2023 = vrot.lane.b32.xlu0 %v1082, 8
    %v2024 = vpop.permute.xlu0 %2023
    %2025 = vrot.lane.b32.xlu0 %v1130, 8
    %v2026 = vpop.permute.xlu0 %2025
    %2035 = vrot.lane.b32.xlu0 %v1426, 16
    %v2036 = vpop.permute.xlu0 %2035
    %2037 = vrot.lane.b32.xlu0 %v1474, 16
    %v2038 = vpop.permute.xlu0 %2037
    %2039 = vrot.lane.b32.xlu0 %v1522, 16
    %v2040 = vpop.permute.xlu0 %2039
    %2041 = vrot.lane.b32.xlu0 %v1570, 16
    %v2042 = vpop.permute.xlu0 %2041
    %2051 = vrot.lane.b32.xlu0 %v1866, 24
    %v2052 = vpop.permute.xlu0 %2051
    %2053 = vrot.lane.b32.xlu0 %v1914, 24
    %v2054 = vpop.permute.xlu0 %2053
    %2055 = vrot.lane.b32.xlu0 %v1962, 24
    %v2056 = vpop.permute.xlu0 %2055
    %2057 = vrot.lane.b32.xlu0 %v2010, 24
    %v2058 = vpop.permute.xlu0 %2057
    %v2063 = vsel %vm263, %v546, %v2020
    %v2064 = vsel %vm263, %v594, %v2022
    %v2065 = vsel %vm263, %v642, %v2024
    %v2066 = vsel %vm263, %v690, %v2026
    %vm2067 = vcmask 130048
    %v2068 = vsel %vm2067, %v2063, %v2036
    %v2069 = vsel %vm2067, %v2064, %v2038
    %v2070 = vsel %vm2067, %v2065, %v2040
    %v2071 = vsel %vm2067, %v2066, %v2042
    %vm2072 = vcmask 195584
    %v2073 = vsel %vm2072, %v2068, %v2052
    %v2074 = vsel %vm2072, %v2069, %v2054
    %v2075 = vsel %vm2072, %v2070, %v2056
    %v2076 = vsel %vm2072, %v2071, %v2058
    %v2077 = vpack.c.bf16 %v2074, %v2073
    %v2078 = vpack.c.bf16 %v2076, %v2075
    %v2079 = vld [vmem:[%s5] sm:$0xf]
    %v2080 = vld [vmem:[%s5 + $0x4] sm:$0xf]
    %v2081 = vld [vmem:[%s5 + $0x8] sm:$0xf]
    %v2082 = vld [vmem:[%s5 + $0xc] sm:$0xf]
    %v2083 = vld [vmem:[%s6] sm:$0x1]
    %v2085 = vlaneseq
    %v2086 = vshrl.u32 %v2085, 7
    %v2087 = vsub.s32 0, %v2086
    %v2088 = vrot.slane %v2083, %v2087
    %v2094 = vunpack.c.l.b16 %v2079
    %v2095 = vunpack.c.l.b16 %v2080
    %v2096 = vunpack.c.l.b16 %v2081
    %v2097 = vunpack.c.l.b16 %v2082
    %v2098 = vpack.c.b16 %v2095, %v2094
    %v2099 = vpack.c.b16 %v2097, %v2096
    %v2103 = vsel %vm85, %v2077, 0
    %v2106 = vsel %vm85, %v2078, 0
    %2108 = vmatprep.subr.bf16.mxu0 0
    %2109 = vmatpush1.bf16.msra.mxu0 0
    %2110 = vmatprep.subr.bf16.mxu0 0
    %2111 = vmatpush1.bf16.msra.mxu0 0
    %2112 = vmatprep.subr.bf16.mxu0 0
    %2113 = vmatpush1.bf16.msra.mxu0 0
    %2114 = vmatprep.subr.bf16.mxu0 0
    %2115 = vmatpush1.bf16.msra.mxu0 0
    %2116 = vmatprep.subr.bf16.mxu0 0
    %2117 = vmatpush1.bf16.msra.mxu0 0
    %2118 = vmatprep.subr.bf16.mxu0 0
    %2119 = vmatpush1.bf16.msra.mxu0 0
    %2120 = vmatprep.subr.bf16.mxu0 0
    %2121 = vmatpush1.bf16.msra.mxu0 %v2099
    %2122 = vmatprep.subr.bf16.mxu0 0
    %2123 = vmatpush1.bf16.msra.mxu0 %v2098
    %2124 = vmatprep.subr.bf16.mxu0 0
    %2125 = vmatpush2.bf16.msra.mxu0 0
    %2126 = vmatprep.subr.bf16.mxu0 0
    %2127 = vmatpush2.bf16.msra.mxu0 0
    %2128 = vmatprep.subr.bf16.mxu0 0
    %2129 = vmatpush2.bf16.msra.mxu0 0
    %2130 = vmatprep.subr.bf16.mxu0 0
    %2131 = vmatpush2.bf16.msra.mxu0 0
    %2132 = vmatprep.subr.bf16.mxu0 0
    %2133 = vmatpush2.bf16.msra.mxu0 0
    %2134 = vmatprep.subr.bf16.mxu0 0
    %2135 = vmatpush2.bf16.msra.mxu0 0
    %2136 = vmatprep.subr.bf16.mxu0 0
    %2137 = vmatpush2.bf16.msra.mxu0 0
    %2138 = vmatprep.subr.bf16.mxu0 0
    %2139 = vmatpush2.bf16.msra.mxu0 0
    %2140 = vmatprep.mubr.bf16.mxu0 0
    %2141 = vmatmul.mubr.bf16.gmra.mxu0 %v2103
    %v2142 = vpop.f32.mrf.mxu0
    %v2143 = vadd.f32 %v2088, %v2142
    %v2144 = vpop.f32.mrf.mxu0
    %v2145 = vpop.f32.mrf.mxu0
    %v2146 = vadd.f32 %v2088, %v2145
    %v2147 = vpop.f32.mrf.mxu0
    %2148 = vmatprep.mubr.bf16.mxu0 0
    %2149 = vmatmul.mubr.bf16.gmra.mxu0 %v2106
    %v2150 = vpop.f32.mrf.mxu0
    %v2151 = vadd.f32 %v2088, %v2150
    %v2152 = vpop.f32.mrf.mxu0
    %v2153 = vpop.f32.mrf.mxu0
    %v2154 = vadd.f32 %v2088, %v2153
    %v2155 = vpop.f32.mrf.mxu0
    %2156 = vdwg.mxu0
    %v2157 = vadd.f32 %v2143, %v81
    %v2158 = vadd.f32 %v2146, %v82
    %v2159 = vadd.f32 %v2151, %v83
    %v2160 = vadd.f32 %v2154, %v84
    %v2161 = vsel %vm85, %v2157, 0.0
    %2162 = vadd.xlane.f32.xlu0 %v2161
    %v2163 = vpop.xlane.xlu0 %2162
    %v2164 = vsel %vm85, %v2158, 0.0
    %2165 = vadd.xlane.f32.xlu0 %v2164
    %v2166 = vpop.xlane.xlu0 %2165
    %v2167 = vsel %vm85, %v2159, 0.0
    %2168 = vadd.xlane.f32.xlu0 %v2167
    %v2169 = vpop.xlane.xlu0 %2168
    %v2170 = vsel %vm85, %v2160, 0.0
    %2171 = vadd.xlane.f32.xlu0 %v2170
    %v2172 = vpop.xlane.xlu0 %2171
    %v2173 = vmul.f32 %v2163, %v98
    %v2174 = vmul.f32 %v2166, %v98
    %v2175 = vmul.f32 %v2169, %v98
    %v2176 = vmul.f32 %v2172, %v98
    %v2177 = vmul.f32 %v2157, %v2157
    %v2178 = vmul.f32 %v2158, %v2158
    %v2179 = vmul.f32 %v2159, %v2159
    %v2180 = vmul.f32 %v2160, %v2160
    %v2181 = vsel %vm85, %v2177, 0.0
    %2182 = vadd.xlane.f32.xlu0 %v2181
    %v2183 = vpop.xlane.xlu0 %2182
    %v2184 = vsel %vm85, %v2178, 0.0
    %2185 = vadd.xlane.f32.xlu0 %v2184
    %v2186 = vpop.xlane.xlu0 %2185
    %v2187 = vsel %vm85, %v2179, 0.0
    %2188 = vadd.xlane.f32.xlu0 %v2187
    %v2189 = vpop.xlane.xlu0 %2188
    %v2190 = vsel %vm85, %v2180, 0.0
    %2191 = vadd.xlane.f32.xlu0 %v2190
    %v2192 = vpop.xlane.xlu0 %2191
    %v2193 = vmul.f32 %v2183, %v98
    %v2194 = vmul.f32 %v2186, %v98
    %v2195 = vmul.f32 %v2189, %v98
    %v2196 = vmul.f32 %v2192, %v98
    %v2197 = vmul.f32 %v2173, %v2173
    %v2198 = vmul.f32 %v2174, %v2174
    %v2199 = vmul.f32 %v2175, %v2175
    %v2200 = vmul.f32 %v2176, %v2176
    %v2201 = vsub.f32 %v2193, %v2197
    %v2202 = vsub.f32 %v2194, %v2198
    %v2203 = vsub.f32 %v2195, %v2199
    %v2204 = vsub.f32 %v2196, %v2200
    %v2205 = vsub.f32 %v2157, %v2173
    %v2206 = vsub.f32 %v2158, %v2174
    %v2207 = vsub.f32 %v2159, %v2175
    %v2208 = vsub.f32 %v2160, %v2176
    %v2209 = vadd.f32 %v2201, 1e-05
    %v2210 = vadd.f32 %v2202, 1e-05
    %v2211 = vadd.f32 %v2203, 1e-05
    %v2212 = vadd.f32 %v2204, 1e-05
    %v2213 = vrsqrt.pop %v2209
    %v2214 = vrsqrt.pop %v2210
    %v2215 = vrsqrt.pop %v2211
    %v2216 = vrsqrt.pop %v2212
    %v2217 = vmul.f32 %v2205, %v2213
    %v2218 = vmul.f32 %v2206, %v2214
    %v2219 = vmul.f32 %v2207, %v2215
    %v2220 = vmul.f32 %v2208, %v2216
    %v2221 = vld [vmem:[#allocation2] sm:$0x1]
    %v2223 = vlaneseq
    %v2224 = vshrl.u32 %v2223, 7
    %v2225 = vsub.s32 0, %v2224
    %v2226 = vrot.slane %v2221, %v2225
    %v2228 = vmul.f32 %v2217, %v2226
    %v2229 = vmul.f32 %v2218, %v2226
    %v2230 = vmul.f32 %v2219, %v2226
    %v2231 = vmul.f32 %v2220, %v2226
    %v2232 = vld [vmem:[#allocation5] sm:$0x1]
    %v2234 = vlaneseq
    %v2235 = vshrl.u32 %v2234, 7
    %v2236 = vsub.s32 0, %v2235
    %v2237 = vrot.slane %v2232, %v2236
    %v2239 = vadd.f32 %v2228, %v2237
    %v2240 = vadd.f32 %v2229, %v2237
    %v2241 = vadd.f32 %v2230, %v2237
    %v2242 = vadd.f32 %v2231, %v2237
    %v2243 = vpack.c.bf16 %v2240, %v2239
    %v2244 = vpack.c.bf16 %v2242, %v2241
    %v2245 = vld [vmem:[%s9] sm:$0xf]
    %v2246 = vld [vmem:[%s9 + $0x4] sm:$0xf]
    %v2247 = vld [vmem:[%s9 + $0x8] sm:$0xf]
    %v2248 = vld [vmem:[%s9 + $0xc] sm:$0xf]
    %v2249 = vld [vmem:[#allocation7] sm:$0x1]
    %v2251 = vlaneseq
    %v2252 = vshrl.u32 %v2251, 7
    %v2253 = vsub.s32 0, %v2252
    %v2254 = vrot.slane %v2249, %v2253
    %v2260 = vunpack.c.l.b16 %v2245
    %v2261 = vunpack.c.l.b16 %v2246
    %v2262 = vunpack.c.l.b16 %v2247
    %v2263 = vunpack.c.l.b16 %v2248
    %v2264 = vpack.c.b16 %v2261, %v2260
    %v2265 = vpack.c.b16 %v2263, %v2262
    %v2269 = vsel %vm85, %v2243, 0
    %v2272 = vsel %vm85, %v2244, 0
    %2274 = vmatprep.subr.bf16.mxu0 0
    %2275 = vmatpush1.bf16.msra.mxu0 0
    %2276 = vmatprep.subr.bf16.mxu0 0
    %2277 = vmatpush1.bf16.msra.mxu0 0
    %2278 = vmatprep.subr.bf16.mxu0 0
    %2279 = vmatpush1.bf16.msra.mxu0 0
    %2280 = vmatprep.subr.bf16.mxu0 0
    %2281 = vmatpush1.bf16.msra.mxu0 0
    %2282 = vmatprep.subr.bf16.mxu0 0
    %2283 = vmatpush1.bf16.msra.mxu0 0
    %2284 = vmatprep.subr.bf16.mxu0 0
    %2285 = vmatpush1.bf16.msra.mxu0 0
    %2286 = vmatprep.subr.bf16.mxu0 0
    %2287 = vmatpush1.bf16.msra.mxu0 %v2265
    %2288 = vmatprep.subr.bf16.mxu0 0
    %2289 = vmatpush1.bf16.msra.mxu0 %v2264
    %2290 = vmatprep.subr.bf16.mxu0 0
    %2291 = vmatpush2.bf16.msra.mxu0 0
    %2292 = vmatprep.subr.bf16.mxu0 0
    %2293 = vmatpush2.bf16.msra.mxu0 0
    %2294 = vmatprep.subr.bf16.mxu0 0
    %2295 = vmatpush2.bf16.msra.mxu0 0
    %2296 = vmatprep.subr.bf16.mxu0 0
    %2297 = vmatpush2.bf16.msra.mxu0 0
    %2298 = vmatprep.subr.bf16.mxu0 0
    %2299 = vmatpush2.bf16.msra.mxu0 0
    %2300 = vmatprep.subr.bf16.mxu0 0
    %2301 = vmatpush2.bf16.msra.mxu0 0
    %2302 = vmatprep.subr.bf16.mxu0 0
    %2303 = vmatpush2.bf16.msra.mxu0 0
    %2304 = vmatprep.subr.bf16.mxu0 0
    %2305 = vmatpush2.bf16.msra.mxu0 0
    %2306 = vmatprep.mubr.bf16.mxu0 0
    %2307 = vmatmul.mubr.bf16.gmra.mxu0 %v2269
    %v2308 = vpop.f32.mrf.mxu0
    %v2309 = vadd.f32 %v2254, %v2308
    %v2310 = vpop.f32.mrf.mxu0
    %v2311 = vpop.f32.mrf.mxu0
    %v2312 = vadd.f32 %v2254, %v2311
    %v2313 = vpop.f32.mrf.mxu0
    %2314 = vmatprep.mubr.bf16.mxu0 0
    %2315 = vmatmul.mubr.bf16.gmra.mxu0 %v2272
    %v2316 = vpop.f32.mrf.mxu0
    %v2317 = vadd.f32 %v2254, %v2316
    %v2318 = vpop.f32.mrf.mxu0
    %v2319 = vpop.f32.mrf.mxu0
    %v2320 = vadd.f32 %v2254, %v2319
    %v2321 = vpop.f32.mrf.mxu0
    %2322 = vdwg.mxu0
    %v2323 = vmul.f32 %v2309, %v2309
    %v2324 = vmul.f32 %v2312, %v2312
    %v2325 = vmul.f32 %v2317, %v2317
    %v2326 = vmul.f32 %v2320, %v2320
    %v2327 = vmul.f32 %v2309, %v2323
    %v2328 = vmul.f32 %v2312, %v2324
    %v2329 = vmul.f32 %v2317, %v2325
    %v2330 = vmul.f32 %v2320, %v2326
    %v2331 = vmul.f32 %v2327, 0.044715
    %v2332 = vmul.f32 %v2328, 0.044715
    %v2333 = vmul.f32 %v2329, 0.044715
    %v2334 = vmul.f32 %v2330, 0.044715
    %v2335 = vadd.f32 %v2309, %v2331
    %v2336 = vadd.f32 %v2312, %v2332
    %v2337 = vadd.f32 %v2317, %v2333
    %v2338 = vadd.f32 %v2320, %v2334
    %v2339 = vmul.f32 %v2335, 0.7978846
    %v2340 = vmul.f32 %v2336, 0.7978846
    %v2341 = vmul.f32 %v2337, 0.7978846
    %v2342 = vmul.f32 %v2338, 0.7978846
    %v2343 = vtanh.pop %v2339
    %v2344 = vtanh.pop %v2340
    %v2345 = vtanh.pop %v2341
    %v2346 = vtanh.pop %v2342
    %v2347 = vadd.f32 %v2343, 1.0
    %v2348 = vadd.f32 %v2344, 1.0
    %v2349 = vadd.f32 %v2345, 1.0
    %v2350 = vadd.f32 %v2346, 1.0
    %v2351 = vmul.f32 %v2347, 0.5
    %v2352 = vmul.f32 %v2348, 0.5
    %v2353 = vmul.f32 %v2349, 0.5
    %v2354 = vmul.f32 %v2350, 0.5
    %v2355 = vmul.f32 %v2309, %v2351
    %v2356 = vmul.f32 %v2312, %v2352
    %v2357 = vmul.f32 %v2317, %v2353
    %v2358 = vmul.f32 %v2320, %v2354
    %v2359 = vpack.c.bf16 %v2356, %v2355
    %v2360 = vpack.c.bf16 %v2358, %v2357
    %v2361 = vld [vmem:[%s11] sm:$0xf]
    %v2362 = vld [vmem:[%s11 + $0x4] sm:$0xf]
    %v2363 = vld [vmem:[%s11 + $0x8] sm:$0xf]
    %v2364 = vld [vmem:[%s11 + $0xc] sm:$0xf]
    %v2365 = vld [vmem:[%s11 + $0x10] sm:$0xf]
    %v2366 = vld [vmem:[%s11 + $0x14] sm:$0xf]
    %v2367 = vld [vmem:[%s11 + $0x18] sm:$0xf]
    %v2368 = vld [vmem:[%s11 + $0x1c] sm:$0xf]
    %v2369 = vld [vmem:[%s11 + $0x20] sm:$0xf]
    %v2370 = vld [vmem:[%s11 + $0x24] sm:$0xf]
    %v2371 = vld [vmem:[%s11 + $0x28] sm:$0xf]
    %v2372 = vld [vmem:[%s11 + $0x2c] sm:$0xf]
    %v2373 = vld [vmem:[%s11 + $0x30] sm:$0xf]
    %v2374 = vld [vmem:[%s11 + $0x34] sm:$0xf]
    %v2375 = vld [vmem:[%s11 + $0x38] sm:$0xf]
    %v2376 = vld [vmem:[%s11 + $0x3c] sm:$0xf]
    %v2377 = vld [vmem:[%s12] sm:$0x1]
    %v2379 = vlaneseq
    %v2380 = vshrl.u32 %v2379, 7
    %v2381 = vsub.s32 0, %v2380
    %v2382 = vrot.slane %v2377, %v2381
    %v2400 = vunpack.c.l.b16 %v2361
    %v2401 = vunpack.c.l.b16 %v2362
    %v2402 = vunpack.c.l.b16 %v2363
    %v2403 = vunpack.c.l.b16 %v2364
    %v2404 = vunpack.c.l.b16 %v2365
    %v2405 = vunpack.c.l.b16 %v2366
    %v2406 = vunpack.c.l.b16 %v2367
    %v2407 = vunpack.c.l.b16 %v2368
    %v2408 = vunpack.c.l.b16 %v2369
    %v2409 = vunpack.c.l.b16 %v2370
    %v2410 = vunpack.c.l.b16 %v2371
    %v2411 = vunpack.c.l.b16 %v2372
    %v2412 = vunpack.c.l.b16 %v2373
    %v2413 = vunpack.c.l.b16 %v2374
    %v2414 = vunpack.c.l.b16 %v2375
    %v2415 = vunpack.c.l.b16 %v2376
    %v2416 = vpack.c.b16 %v2401, %v2400
    %v2417 = vpack.c.b16 %v2403, %v2402
    %v2418 = vpack.c.b16 %v2405, %v2404
    %v2419 = vpack.c.b16 %v2407, %v2406
    %v2420 = vpack.c.b16 %v2409, %v2408
    %v2421 = vpack.c.b16 %v2411, %v2410
    %v2422 = vpack.c.b16 %v2413, %v2412
    %v2423 = vpack.c.b16 %v2415, %v2414
    %2432 = vmatprep.subr.bf16.mxu0 0
    %2433 = vmatpush1.bf16.msra.mxu0 %v2423
    %2434 = vmatprep.subr.bf16.mxu0 0
    %2435 = vmatpush1.bf16.msra.mxu0 %v2422
    %2436 = vmatprep.subr.bf16.mxu0 0
    %2437 = vmatpush1.bf16.msra.mxu0 %v2421
    %2438 = vmatprep.subr.bf16.mxu0 0
    %2439 = vmatpush1.bf16.msra.mxu0 %v2420
    %2440 = vmatprep.subr.bf16.mxu0 0
    %2441 = vmatpush1.bf16.msra.mxu0 %v2419
    %2442 = vmatprep.subr.bf16.mxu0 0
    %2443 = vmatpush1.bf16.msra.mxu0 %v2418
    %2444 = vmatprep.subr.bf16.mxu0 0
    %2445 = vmatpush1.bf16.msra.mxu0 %v2417
    %2446 = vmatprep.subr.bf16.mxu0 0
    %2447 = vmatpush1.bf16.msra.mxu0 %v2416
    %2448 = vmatprep.subr.bf16.mxu0 0
    %2449 = vmatpush2.bf16.msra.mxu0 0
    %2450 = vmatprep.subr.bf16.mxu0 0
    %2451 = vmatpush2.bf16.msra.mxu0 0
    %2452 = vmatprep.subr.bf16.mxu0 0
    %2453 = vmatpush2.bf16.msra.mxu0 0
    %2454 = vmatprep.subr.bf16.mxu0 0
    %2455 = vmatpush2.bf16.msra.mxu0 0
    %2456 = vmatprep.subr.bf16.mxu0 0
    %2457 = vmatpush2.bf16.msra.mxu0 0
    %2458 = vmatprep.subr.bf16.mxu0 0
    %2459 = vmatpush2.bf16.msra.mxu0 0
    %2460 = vmatprep.subr.bf16.mxu0 0
    %2461 = vmatpush2.bf16.msra.mxu0 0
    %2462 = vmatprep.subr.bf16.mxu0 0
    %2463 = vmatpush2.bf16.msra.mxu0 0
    %2464 = vmatprep.mubr.bf16.mxu0 0
    %2465 = vmatmul.mubr.bf16.gmra.mxu0 %v2359
    %v2466 = vpop.f32.mrf.mxu0
    %v2467 = vadd.f32 %v2382, %v2466
    %v2468 = vpop.f32.mrf.mxu0
    %v2469 = vpop.f32.mrf.mxu0
    %v2470 = vadd.f32 %v2382, %v2469
    %v2471 = vpop.f32.mrf.mxu0
    %2472 = vmatprep.mubr.bf16.mxu0 0
    %2473 = vmatmul.mubr.bf16.gmra.mxu0 %v2360
    %v2474 = vpop.f32.mrf.mxu0
    %v2475 = vadd.f32 %v2382, %v2474
    %v2476 = vpop.f32.mrf.mxu0
    %v2477 = vpop.f32.mrf.mxu0
    %v2478 = vadd.f32 %v2382, %v2477
    %v2479 = vpop.f32.mrf.mxu0
    %2480 = vdwg.mxu0
    %v2481 = vadd.f32 %v2467, %v2157
    %v2482 = vadd.f32 %v2470, %v2158
    %v2483 = vadd.f32 %v2475, %v2159
    %v2484 = vadd.f32 %v2478, %v2160
    %2485 = vst.msk [vmem:[#allocation8] sm:$0xff] %vm85, %v2481
    %2486 = vst.msk [vmem:[#allocation8 + $0x8] sm:$0xff] %vm85, %v2482
    %2487 = vst.msk [vmem:[#allocation8 + $0x10] sm:$0xff] %vm85, %v2483
    %2488 = vst.msk [vmem:[#allocation8 + $0x18] sm:$0xff] %vm85, %v2484
    // Predicated region
    $region66: #{tpu_custom_call.1} parent=1 // pred_check
      _
    $region67: #{tpu_custom_call.1} parent=1 // pred_check_branch
      %2490 = sbr.rel (0) target = $region69
    $region68: #{tpu_custom_call.1} parent=1 // pred_region
      %s2492 = ssub.s32 512, 512
      %2493 = vsyncadd [#allocation4], %s2492
      %s2494 = sshll.u32 [#allocation8], 4
      %s2495 = int_to_ptr.vmem [resolvable:$true] %s2494
      %2500 = dma.vmem_to_hbm [thread:$0]  %s2495, 512, %s13, [#allocation4], 128, 128, 8
    $region69: #{tpu_custom_call.1} parent=1 // pred_fallthru
      _
    // Predicated region
    $region70: #{tpu_custom_call.1} parent=1 // pred_check
      _
    $region71: #{tpu_custom_call.1} parent=1 // pred_check_branch
      %2502 = sbr.rel (0) target = $region73
    $region72: #{tpu_custom_call.1} parent=1 // pred_region
      %2503 = dma.done [#allocation4], 512
    $region73: #{tpu_custom_call.1} parent=1 // pred_fallthru
      _
    %2504 = vsyncpa [#allocation3], 1
    %2505 = vsyncpa [#allocation6], 1
    %2506 = vsyncpa [#allocation4], 1

</llo_original>
